<compile_context>
chip_gen: v6e
topology: v6e:2x2x1
jax: 0.10.0
libtpu: 0.0.40
codegen_flags: <defaults>
</compile_context>

<pallas_src>
import functools

import jax
import jax.numpy as jnp
from jax import lax
from jax.experimental import pallas as pl
from jax.experimental.pallas import tpu as pltpu


# ------------------------------------ kernel -----------------------------------------

def rnn_classifier_kernel(tok_ref, w_ref, b_ref, o_ref, *, VP, HP, T, B, BR, O):
    TR = T * BR

    # ---- unpack the packed operands (static, tile-aligned slices) -------------------
    wihf = w_ref[0:VP, :]                              # (VP, 3HP) bf16  fold(table@Wih_f)
    wihb = w_ref[VP:2 * VP, :]                         # (VP, 3HP) bf16  fold(table@Wih_b)
    whh = w_ref[2 * VP:2 * VP + HP, :]                 # (HP, 3HP) bf16
    wo_f = w_ref[2 * VP + HP:2 * VP + 2 * HP, :]       # (HP, 3HP) bf16  (cols >= O are 0)
    wo_b = w_ref[2 * VP + 2 * HP:2 * VP + 3 * HP, :]   # (HP, 3HP) bf16

    bgif = b_ref[0:1, :]                               # (1, 3HP) f32  bih_f + [bhh_r, bhh_z, 0]
    bgib = b_ref[1:2, :]                               # (1, 3HP) f32
    bhnf = b_ref[2:3, 0:HP]                            # (1, HP)  f32  bhh_n (forward)
    bhnb = b_ref[3:4, 0:HP]                            # (1, HP)  f32  bhh_n (backward)
    bout = b_ref[4:5, :]                               # (1, 3HP) f32  (cols >= O are 0)

    # ---- fused embedding gather + input projection (bf16 one-hot matmul) ------------
    # TODO(synk): for realistic vocab sizes replace the (TR, VP) one-hot with a
    # scalar-prefetch row gather; at VP=32 the one-hot is the cheaper option.
    tok = tok_ref[...]                                                       # (TR, 1) i32
    onehot = (tok == lax.broadcasted_iota(jnp.int32, (TR, VP), 1)).astype(jnp.bfloat16)
    gi_f = jnp.dot(onehot, wihf, preferred_element_type=jnp.float32) + bgif  # (TR, 3HP)

    # Backward direction only needs the last timestep: out[-1] of the reverse GRU is a
    # single step from h0 = 0, so h@whh_b == 0 and whh_b never enters the kernel.
    tok_b = tok_ref[TR - BR:TR, :]
    onehot_b = (tok_b == lax.broadcasted_iota(jnp.int32, (BR, VP), 1)).astype(jnp.bfloat16)
    gi_b = jnp.dot(onehot_b, wihb, preferred_element_type=jnp.float32) + bgib  # (BR, 3HP)

    def step_from_zero(gi, bhn):
        r = jax.nn.sigmoid(gi[:, 0:HP])
        z = jax.nn.sigmoid(gi[:, HP:2 * HP])
        n = jnp.tanh(gi[:, 2 * HP:3 * HP] + r * bhn)
        return n - z * n                                 # == (1 - z) * n   (h_prev = 0)

    # ---- forward recurrence, statically unrolled, step 0 peeled (h0 = 0 => gh = 0) --
    h = step_from_zero(gi_f[0:BR, :], bhnf)              # (BR, HP) f32, pad lanes stay 0
    for t in range(1, T):
        # TODO(synk): whh could be held in the MXU across the loop via matmul_push_rhs.
        gh = jnp.dot(h.astype(jnp.bfloat16), whh, preferred_element_type=jnp.float32)
        gi_t = gi_f[t * BR:(t + 1) * BR, :]              # static (8,128)-aligned slice
        r = jax.nn.sigmoid(gi_t[:, 0:HP] + gh[:, 0:HP])
        z = jax.nn.sigmoid(gi_t[:, HP:2 * HP] + gh[:, HP:2 * HP])
        n = jnp.tanh(gi_t[:, 2 * HP:3 * HP] + r * (gh[:, 2 * HP:3 * HP] + bhnf))
        h = n + z * (h - n)

    # ---- backward direction: single reverse step from zero state --------------------
    h_b = step_from_zero(gi_b, bhnb)                     # (BR, HP) f32

    # ---- epilogue: two bf16 matmuls (no lane concat), f32 accumulation, + bias ------
    logits = (jnp.dot(h.astype(jnp.bfloat16), wo_f, preferred_element_type=jnp.float32)
              + jnp.dot(h_b.astype(jnp.bfloat16), wo_b, preferred_element_type=jnp.float32)
              + bout)                                    # (BR, 3HP); only [:B, :O] real
    # TODO(synk): F.dropout(p=0.7) is identity at inference; not applied here.
    o_ref[...] = logits[0:B, 0:O]


# ------------------------------- host-side parameter prep ----------------------------

def _pad_cols_per_gate(w, H, HP):
    """(in, 3H) -> (in, 3*HP) with gate g in columns [g*HP, g*HP + H); pad cols zero."""
    out = jnp.zeros((w.shape[0], 3 * HP), w.dtype)
    for g in range(3):
        out = out.at[:, g * HP:g * HP + H].set(w[:, g * H:(g + 1) * H])
    return out


def prepare_kernel_params(params):
    """Pack everything into one bf16 weight blob + one f32 bias blob. Run ONCE."""
    table = params["embedding"]                       # (vocab, E) f32
    vocab, _E = table.shape
    H = params["whh_f"].shape[0]
    HP = ((H + 127) // 128) * 128                     # lane-aligned gate width
    VP = ((vocab + 15) // 16) * 16                    # bf16 sublane-aligned row count
    O = params["wout"].shape[1]
    G3 = 3 * HP

    def fold_dir(wih, bih, bhh):
        # Fold embedding into the input projection (exact f32, then bf16).
        wih_p = _pad_cols_per_gate(wih, H, HP)                         # (E, 3HP) f32
        fold = jnp.dot(table, wih_p)                                   # (vocab, 3HP) f32
        fold_p = jnp.zeros((VP, G3), jnp.float32).at[:vocab, :].set(fold)
        # Fold bhh_{r,z} into the input-side bias; bhh_n stays separate (inside r*()).
        bgi = jnp.concatenate([bih[:, 0:H] + bhh[:, 0:H],
                               bih[:, H:2 * H] + bhh[:, H:2 * H],
                               bih[:, 2 * H:3 * H]], axis=1)           # (1, 3H)
        bgi_p = _pad_cols_per_gate(bgi, H, HP)                         # (1, 3HP)
        bhn_p = jnp.zeros((1, HP), jnp.float32).at[:, :H].set(bhh[:, 2 * H:3 * H])
        return fold_p.astype(jnp.bfloat16), bgi_p, bhn_p

    wihf, bgif, bhnf = fold_dir(params["wih_f"], params["bih_f"], params["bhh_f"])
    wihb, bgib, bhnb = fold_dir(params["wih_b"], params["bih_b"], params["bhh_b"])
    # whh_b never enters the kernel: backward out[-1] is one step from h0 = 0.

    whh_rows = jnp.zeros((HP, 3 * H), jnp.float32).at[:H, :].set(params["whh_f"])
    whh_p = _pad_cols_per_gate(whh_rows, H, HP).astype(jnp.bfloat16)   # (HP, 3HP)

    wout = params["wout"]                                              # (2H, O)
    wo_f = jnp.zeros((HP, G3), jnp.float32).at[:H, :O].set(wout[0:H, :]).astype(jnp.bfloat16)
    wo_b = jnp.zeros((HP, G3), jnp.float32).at[:H, :O].set(wout[H:2 * H, :]).astype(jnp.bfloat16)

    wblob = jnp.concatenate([wihf, wihb, whh_p, wo_f, wo_b], axis=0)   # (2VP+3HP, 3HP) bf16

    bblob = jnp.zeros((8, G3), jnp.float32)
    bblob = bblob.at[0, :].set(bgif[0])
    bblob = bblob.at[1, :].set(bgib[0])
    bblob = bblob.at[2, :HP].set(bhnf[0])
    bblob = bblob.at[3, :HP].set(bhnb[0])
    bblob = bblob.at[4, :O].set(params["bout"][0])

    return dict(wblob=wblob, bblob=bblob, VP=VP, HP=HP, O=O)


def make_forward(params, T, B):
    """Prep params once, build the pallas_call once, return a jitted forward(tokens)."""
    kp = prepare_kernel_params(params)
    VP, HP, O = kp["VP"], kp["HP"], kp["O"]
    BR = ((B + 7) // 8) * 8                            # sublane-padded batch rows/step

    kernel = functools.partial(rnn_classifier_kernel,
                               VP=VP, HP=HP, T=T, B=B, BR=BR, O=O)
    vmem = pl.BlockSpec(memory_space=pltpu.MemorySpace.VMEM)
    call = pl.pallas_call(
        kernel,
        out_shape=jax.ShapeDtypeStruct((B, O), jnp.float32),
        in_specs=[vmem, vmem, vmem],
        out_specs=vmem,
    )

    wblob, bblob = kp["wblob"], kp["bblob"]

    @jax.jit
    def _fwd(tokens, wblob, bblob):
        # time-major rows: tokens[t, b] lands at row t*BR + b; pad rows hold token 0.
        tok = jnp.pad(tokens.astype(jnp.int32), ((0, 0), (0, BR - B))).reshape(T * BR, 1)
        return call(tok, wblob, bblob)

    def forward(tokens):
        return _fwd(tokens, wblob, bblob)

    return forward


# ------------------------------- PyTorch-faithful init -------------------------------

def init_params(key, vocab, E, H, O):
    ks = jax.random.split(key, 12)
    initrange = 0.1

    def u(k, shape):
        return jax.random.uniform(k, shape, jnp.float32, -initrange, initrange)

    # nn.Embedding default init: N(0, 1)
    embedding = jax.random.normal(ks[0], (vocab, E), jnp.float32)

    # GRU weights: init_weights() -> uniform(-0.1, 0.1); PyTorch stores (3H, in),
    # pre-transpose to (in, 3H) so the kernel does x @ W.
    wih_f = u(ks[1], (3 * H, E)).T
    whh_f = u(ks[2], (3 * H, H)).T
    wih_b = u(ks[3], (3 * H, E)).T
    whh_b = u(ks[4], (3 * H, H)).T

    # init_bias(): uniform(-0.1, 0.1) then bias[n//4 : n//2] = 1.0 with n = 3H.
    def make_bias(k):
        n = 3 * H
        b = u(k, (n,))
        b = b.at[n // 4: n // 2].set(1.0)
        return b.reshape(1, n)

    bih_f = make_bias(ks[5])
    bhh_f = make_bias(ks[6])
    bih_b = make_bias(ks[7])
    bhh_b = make_bias(ks[8])

    # nn.Linear(2H, O) default init: uniform(-1/sqrt(fan_in), 1/sqrt(fan_in)).
    bound = 1.0 / (2 * H) ** 0.5
    wout = jax.random.uniform(ks[9], (O, 2 * H), jnp.float32, -bound, bound).T   # (2H, O)
    bout = jax.random.uniform(ks[10], (1, O), jnp.float32, -bound, bound)

    return dict(embedding=embedding,
                wih_f=wih_f, whh_f=whh_f, bih_f=bih_f, bhh_f=bhh_f,
                wih_b=wih_b, whh_b=whh_b, bih_b=bih_b, bhh_b=bhh_b,
                wout=wout, bout=bout)


if __name__ == "__main__":
    vocab, E, H, O = 20, 16, 32, 4   # input_dim, embedding_size, rnn_hidden_size, output_dim
    T, B = 8, 2                       # seq_len, batch

    key = jax.random.PRNGKey(0)
    kparam, ktok = jax.random.split(key)
    params = init_params(kparam, vocab, E, H, O)
    tokens = jax.random.randint(ktok, (T, B), 0, vocab, dtype=jnp.int32)

    forward = make_forward(params, T, B)   # param prep + pallas_call built once
    logits = forward(tokens)
    jax.block_until_ready(logits)
    assert logits.shape == (B, O) and logits.dtype == jnp.float32
    print("KERNEL_OK")
</pallas_src>

<mosaic_0001>
module attributes {stable_mosaic.version = 11 : i64} {
  func.func @rnn_classifier_kernel(%arg0: memref<64x1xi32, #tpu.memory_space<vmem>>, %arg1: memref<448x384xbf16, #tpu.memory_space<vmem>>, %arg2: memref<8x384xf32, #tpu.memory_space<vmem>>, %arg3: memref<2x4xf32, #tpu.memory_space<vmem>>) attributes {dimension_semantics = [], scalar_prefetch = 0 : i64, scratch_operands = 0 : i64, tpu.core_type = #tpu.core_type<tc>} {
    %c0 = arith.constant 0 : index
    %c0_0 = arith.constant 0 : index
    %0 = vector.load %arg1[%c0, %c0_0] : memref<448x384xbf16, #tpu.memory_space<vmem>>, vector<32x384xbf16>
    %c32 = arith.constant 32 : index
    %c0_1 = arith.constant 0 : index
    %1 = vector.load %arg1[%c32, %c0_1] : memref<448x384xbf16, #tpu.memory_space<vmem>>, vector<32x384xbf16>
    %c64 = arith.constant 64 : index
    %c0_2 = arith.constant 0 : index
    %2 = vector.load %arg1[%c64, %c0_2] : memref<448x384xbf16, #tpu.memory_space<vmem>>, vector<128x384xbf16>
    %c192 = arith.constant 192 : index
    %c0_3 = arith.constant 0 : index
    %3 = vector.load %arg1[%c192, %c0_3] : memref<448x384xbf16, #tpu.memory_space<vmem>>, vector<128x384xbf16>
    %c320 = arith.constant 320 : index
    %c0_4 = arith.constant 0 : index
    %4 = vector.load %arg1[%c320, %c0_4] : memref<448x384xbf16, #tpu.memory_space<vmem>>, vector<128x384xbf16>
    %c0_5 = arith.constant 0 : index
    %c0_6 = arith.constant 0 : index
    %5 = vector.load %arg2[%c0_5, %c0_6] : memref<8x384xf32, #tpu.memory_space<vmem>>, vector<1x384xf32>
    %c1 = arith.constant 1 : index
    %c0_7 = arith.constant 0 : index
    %6 = vector.load %arg2[%c1, %c0_7] : memref<8x384xf32, #tpu.memory_space<vmem>>, vector<1x384xf32>
    %c2 = arith.constant 2 : index
    %c0_8 = arith.constant 0 : index
    %7 = vector.load %arg2[%c2, %c0_8] : memref<8x384xf32, #tpu.memory_space<vmem>>, vector<1x128xf32>
    %c3 = arith.constant 3 : index
    %c0_9 = arith.constant 0 : index
    %8 = vector.load %arg2[%c3, %c0_9] : memref<8x384xf32, #tpu.memory_space<vmem>>, vector<1x128xf32>
    %c4 = arith.constant 4 : index
    %c0_10 = arith.constant 0 : index
    %9 = vector.load %arg2[%c4, %c0_10] : memref<8x384xf32, #tpu.memory_space<vmem>>, vector<1x384xf32>
    %c0_11 = arith.constant 0 : index
    %c0_12 = arith.constant 0 : index
    %10 = vector.load %arg0[%c0_11, %c0_12] : memref<64x1xi32, #tpu.memory_space<vmem>>, vector<64x1xi32>
    %11 = tpu.iota {dimensions = array<i32: 1>} : vector<64x32xi32>
    %12 = vector.broadcast %10 : vector<64x1xi32> to vector<64x32xi32>
    %13 = arith.cmpi eq, %12, %11 : vector<64x32xi32>
    %14 = arith.extui %13 : vector<64x32xi1> to vector<64x32xi32>
    %15 = arith.sitofp %14 : vector<64x32xi32> to vector<64x32xf32>
    %16 = arith.truncf %15 : vector<64x32xf32> to vector<64x32xbf16>
    %cst = arith.constant dense<0.000000e+00> : vector<64x384xf32>
    %17 = tpu.matmul %16, %0, %cst {dimension_numbers = #tpu.dot_dimension_numbers<[1], [0], [0], [1], [0, 0, 1, 1], [], []>} : vector<64x32xbf16>, vector<32x384xbf16>, vector<64x384xf32> -> vector<64x384xf32>
    %18 = vector.broadcast %5 : vector<1x384xf32> to vector<64x384xf32>
    %19 = arith.addf %17, %18 : vector<64x384xf32>
    %c56 = arith.constant 56 : index
    %c0_13 = arith.constant 0 : index
    %20 = vector.load %arg0[%c56, %c0_13] : memref<64x1xi32, #tpu.memory_space<vmem>>, vector<8x1xi32>
    %21 = tpu.iota {dimensions = array<i32: 1>} : vector<8x32xi32>
    %22 = vector.broadcast %20 : vector<8x1xi32> to vector<8x32xi32>
    %23 = arith.cmpi eq, %22, %21 : vector<8x32xi32>
    %24 = arith.extui %23 : vector<8x32xi1> to vector<8x32xi32>
    %25 = arith.sitofp %24 : vector<8x32xi32> to vector<8x32xf32>
    %26 = arith.truncf %25 : vector<8x32xf32> to vector<8x32xbf16>
    %cst_14 = arith.constant dense<0.000000e+00> : vector<8x384xf32>
    %27 = tpu.matmul %26, %1, %cst_14 {dimension_numbers = #tpu.dot_dimension_numbers<[1], [0], [0], [1], [0, 0, 1, 1], [], []>} : vector<8x32xbf16>, vector<32x384xbf16>, vector<8x384xf32> -> vector<8x384xf32>
    %28 = vector.broadcast %6 : vector<1x384xf32> to vector<8x384xf32>
    %29 = arith.addf %27, %28 : vector<8x384xf32>
    %30 = vector.extract_strided_slice %19 {offsets = [0, 0], sizes = [8, 384], strides = [1, 1]} : vector<64x384xf32> to vector<8x384xf32>
    %31 = vector.extract_strided_slice %30 {offsets = [0, 0], sizes = [8, 128], strides = [1, 1]} : vector<8x384xf32> to vector<8x128xf32>
    %32 = arith.negf %31 : vector<8x128xf32>
    %33 = math.exp %32 : vector<8x128xf32>
    %cst_15 = arith.constant 1.000000e+00 : f32
    %34 = vector.broadcast %cst_15 : f32 to vector<8x128xf32>
    %35 = arith.addf %34, %33 : vector<8x128xf32>
    %36 = arith.divf %34, %35 : vector<8x128xf32>
    %37 = vector.extract_strided_slice %30 {offsets = [0, 128], sizes = [8, 128], strides = [1, 1]} : vector<8x384xf32> to vector<8x128xf32>
    %38 = arith.negf %37 : vector<8x128xf32>
    %39 = math.exp %38 : vector<8x128xf32>
    %cst_16 = arith.constant 1.000000e+00 : f32
    %40 = vector.broadcast %cst_16 : f32 to vector<8x128xf32>
    %41 = arith.addf %40, %39 : vector<8x128xf32>
    %42 = arith.divf %40, %41 : vector<8x128xf32>
    %43 = vector.extract_strided_slice %30 {offsets = [0, 256], sizes = [8, 128], strides = [1, 1]} : vector<8x384xf32> to vector<8x128xf32>
    %44 = vector.broadcast %7 : vector<1x128xf32> to vector<8x128xf32>
    %45 = arith.mulf %36, %44 : vector<8x128xf32>
    %46 = arith.addf %43, %45 : vector<8x128xf32>
    %47 = math.tanh %46 : vector<8x128xf32>
    %48 = arith.mulf %42, %47 : vector<8x128xf32>
    %49 = arith.subf %47, %48 : vector<8x128xf32>
    %50 = arith.truncf %49 : vector<8x128xf32> to vector<8x128xbf16>
    %cst_17 = arith.constant dense<0.000000e+00> : vector<8x384xf32>
    %51 = tpu.matmul %50, %2, %cst_17 {dimension_numbers = #tpu.dot_dimension_numbers<[1], [0], [0], [1], [0, 0, 1, 1], [], []>} : vector<8x128xbf16>, vector<128x384xbf16>, vector<8x384xf32> -> vector<8x384xf32>
    %52 = vector.extract_strided_slice %19 {offsets = [8, 0], sizes = [8, 384], strides = [1, 1]} : vector<64x384xf32> to vector<8x384xf32>
    %53 = vector.extract_strided_slice %52 {offsets = [0, 0], sizes = [8, 128], strides = [1, 1]} : vector<8x384xf32> to vector<8x128xf32>
    %54 = vector.extract_strided_slice %51 {offsets = [0, 0], sizes = [8, 128], strides = [1, 1]} : vector<8x384xf32> to vector<8x128xf32>
    %55 = arith.addf %53, %54 : vector<8x128xf32>
    %56 = arith.negf %55 : vector<8x128xf32>
    %57 = math.exp %56 : vector<8x128xf32>
    %cst_18 = arith.constant 1.000000e+00 : f32
    %58 = vector.broadcast %cst_18 : f32 to vector<8x128xf32>
    %59 = arith.addf %58, %57 : vector<8x128xf32>
    %60 = arith.divf %58, %59 : vector<8x128xf32>
    %61 = vector.extract_strided_slice %52 {offsets = [0, 128], sizes = [8, 128], strides = [1, 1]} : vector<8x384xf32> to vector<8x128xf32>
    %62 = vector.extract_strided_slice %51 {offsets = [0, 128], sizes = [8, 128], strides = [1, 1]} : vector<8x384xf32> to vector<8x128xf32>
    %63 = arith.addf %61, %62 : vector<8x128xf32>
    %64 = arith.negf %63 : vector<8x128xf32>
    %65 = math.exp %64 : vector<8x128xf32>
    %cst_19 = arith.constant 1.000000e+00 : f32
    %66 = vector.broadcast %cst_19 : f32 to vector<8x128xf32>
    %67 = arith.addf %66, %65 : vector<8x128xf32>
    %68 = arith.divf %66, %67 : vector<8x128xf32>
    %69 = vector.extract_strided_slice %52 {offsets = [0, 256], sizes = [8, 128], strides = [1, 1]} : vector<8x384xf32> to vector<8x128xf32>
    %70 = vector.extract_strided_slice %51 {offsets = [0, 256], sizes = [8, 128], strides = [1, 1]} : vector<8x384xf32> to vector<8x128xf32>
    %71 = vector.broadcast %7 : vector<1x128xf32> to vector<8x128xf32>
    %72 = arith.addf %70, %71 : vector<8x128xf32>
    %73 = arith.mulf %60, %72 : vector<8x128xf32>
    %74 = arith.addf %69, %73 : vector<8x128xf32>
    %75 = math.tanh %74 : vector<8x128xf32>
    %76 = arith.subf %49, %75 : vector<8x128xf32>
    %77 = arith.mulf %68, %76 : vector<8x128xf32>
    %78 = arith.addf %75, %77 : vector<8x128xf32>
    %79 = arith.truncf %78 : vector<8x128xf32> to vector<8x128xbf16>
    %cst_20 = arith.constant dense<0.000000e+00> : vector<8x384xf32>
    %80 = tpu.matmul %79, %2, %cst_20 {dimension_numbers = #tpu.dot_dimension_numbers<[1], [0], [0], [1], [0, 0, 1, 1], [], []>} : vector<8x128xbf16>, vector<128x384xbf16>, vector<8x384xf32> -> vector<8x384xf32>
    %81 = vector.extract_strided_slice %19 {offsets = [16, 0], sizes = [8, 384], strides = [1, 1]} : vector<64x384xf32> to vector<8x384xf32>
    %82 = vector.extract_strided_slice %81 {offsets = [0, 0], sizes = [8, 128], strides = [1, 1]} : vector<8x384xf32> to vector<8x128xf32>
    %83 = vector.extract_strided_slice %80 {offsets = [0, 0], sizes = [8, 128], strides = [1, 1]} : vector<8x384xf32> to vector<8x128xf32>
    %84 = arith.addf %82, %83 : vector<8x128xf32>
    %85 = arith.negf %84 : vector<8x128xf32>
    %86 = math.exp %85 : vector<8x128xf32>
    %cst_21 = arith.constant 1.000000e+00 : f32
    %87 = vector.broadcast %cst_21 : f32 to vector<8x128xf32>
    %88 = arith.addf %87, %86 : vector<8x128xf32>
    %89 = arith.divf %87, %88 : vector<8x128xf32>
    %90 = vector.extract_strided_slice %81 {offsets = [0, 128], sizes = [8, 128], strides = [1, 1]} : vector<8x384xf32> to vector<8x128xf32>
    %91 = vector.extract_strided_slice %80 {offsets = [0, 128], sizes = [8, 128], strides = [1, 1]} : vector<8x384xf32> to vector<8x128xf32>
    %92 = arith.addf %90, %91 : vector<8x128xf32>
    %93 = arith.negf %92 : vector<8x128xf32>
    %94 = math.exp %93 : vector<8x128xf32>
    %cst_22 = arith.constant 1.000000e+00 : f32
    %95 = vector.broadcast %cst_22 : f32 to vector<8x128xf32>
    %96 = arith.addf %95, %94 : vector<8x128xf32>
    %97 = arith.divf %95, %96 : vector<8x128xf32>
    %98 = vector.extract_strided_slice %81 {offsets = [0, 256], sizes = [8, 128], strides = [1, 1]} : vector<8x384xf32> to vector<8x128xf32>
    %99 = vector.extract_strided_slice %80 {offsets = [0, 256], sizes = [8, 128], strides = [1, 1]} : vector<8x384xf32> to vector<8x128xf32>
    %100 = vector.broadcast %7 : vector<1x128xf32> to vector<8x128xf32>
    %101 = arith.addf %99, %100 : vector<8x128xf32>
    %102 = arith.mulf %89, %101 : vector<8x128xf32>
    %103 = arith.addf %98, %102 : vector<8x128xf32>
    %104 = math.tanh %103 : vector<8x128xf32>
    %105 = arith.subf %78, %104 : vector<8x128xf32>
    %106 = arith.mulf %97, %105 : vector<8x128xf32>
    %107 = arith.addf %104, %106 : vector<8x128xf32>
    %108 = arith.truncf %107 : vector<8x128xf32> to vector<8x128xbf16>
    %cst_23 = arith.constant dense<0.000000e+00> : vector<8x384xf32>
    %109 = tpu.matmul %108, %2, %cst_23 {dimension_numbers = #tpu.dot_dimension_numbers<[1], [0], [0], [1], [0, 0, 1, 1], [], []>} : vector<8x128xbf16>, vector<128x384xbf16>, vector<8x384xf32> -> vector<8x384xf32>
    %110 = vector.extract_strided_slice %19 {offsets = [24, 0], sizes = [8, 384], strides = [1, 1]} : vector<64x384xf32> to vector<8x384xf32>
    %111 = vector.extract_strided_slice %110 {offsets = [0, 0], sizes = [8, 128], strides = [1, 1]} : vector<8x384xf32> to vector<8x128xf32>
    %112 = vector.extract_strided_slice %109 {offsets = [0, 0], sizes = [8, 128], strides = [1, 1]} : vector<8x384xf32> to vector<8x128xf32>
    %113 = arith.addf %111, %112 : vector<8x128xf32>
    %114 = arith.negf %113 : vector<8x128xf32>
    %115 = math.exp %114 : vector<8x128xf32>
    %cst_24 = arith.constant 1.000000e+00 : f32
    %116 = vector.broadcast %cst_24 : f32 to vector<8x128xf32>
    %117 = arith.addf %116, %115 : vector<8x128xf32>
    %118 = arith.divf %116, %117 : vector<8x128xf32>
    %119 = vector.extract_strided_slice %110 {offsets = [0, 128], sizes = [8, 128], strides = [1, 1]} : vector<8x384xf32> to vector<8x128xf32>
    %120 = vector.extract_strided_slice %109 {offsets = [0, 128], sizes = [8, 128], strides = [1, 1]} : vector<8x384xf32> to vector<8x128xf32>
    %121 = arith.addf %119, %120 : vector<8x128xf32>
    %122 = arith.negf %121 : vector<8x128xf32>
    %123 = math.exp %122 : vector<8x128xf32>
    %cst_25 = arith.constant 1.000000e+00 : f32
    %124 = vector.broadcast %cst_25 : f32 to vector<8x128xf32>
    %125 = arith.addf %124, %123 : vector<8x128xf32>
    %126 = arith.divf %124, %125 : vector<8x128xf32>
    %127 = vector.extract_strided_slice %110 {offsets = [0, 256], sizes = [8, 128], strides = [1, 1]} : vector<8x384xf32> to vector<8x128xf32>
    %128 = vector.extract_strided_slice %109 {offsets = [0, 256], sizes = [8, 128], strides = [1, 1]} : vector<8x384xf32> to vector<8x128xf32>
    %129 = vector.broadcast %7 : vector<1x128xf32> to vector<8x128xf32>
    %130 = arith.addf %128, %129 : vector<8x128xf32>
    %131 = arith.mulf %118, %130 : vector<8x128xf32>
    %132 = arith.addf %127, %131 : vector<8x128xf32>
    %133 = math.tanh %132 : vector<8x128xf32>
    %134 = arith.subf %107, %133 : vector<8x128xf32>
    %135 = arith.mulf %126, %134 : vector<8x128xf32>
    %136 = arith.addf %133, %135 : vector<8x128xf32>
    %137 = arith.truncf %136 : vector<8x128xf32> to vector<8x128xbf16>
    %cst_26 = arith.constant dense<0.000000e+00> : vector<8x384xf32>
    %138 = tpu.matmul %137, %2, %cst_26 {dimension_numbers = #tpu.dot_dimension_numbers<[1], [0], [0], [1], [0, 0, 1, 1], [], []>} : vector<8x128xbf16>, vector<128x384xbf16>, vector<8x384xf32> -> vector<8x384xf32>
    %139 = vector.extract_strided_slice %19 {offsets = [32, 0], sizes = [8, 384], strides = [1, 1]} : vector<64x384xf32> to vector<8x384xf32>
    %140 = vector.extract_strided_slice %139 {offsets = [0, 0], sizes = [8, 128], strides = [1, 1]} : vector<8x384xf32> to vector<8x128xf32>
    %141 = vector.extract_strided_slice %138 {offsets = [0, 0], sizes = [8, 128], strides = [1, 1]} : vector<8x384xf32> to vector<8x128xf32>
    %142 = arith.addf %140, %141 : vector<8x128xf32>
    %143 = arith.negf %142 : vector<8x128xf32>
    %144 = math.exp %143 : vector<8x128xf32>
    %cst_27 = arith.constant 1.000000e+00 : f32
    %145 = vector.broadcast %cst_27 : f32 to vector<8x128xf32>
    %146 = arith.addf %145, %144 : vector<8x128xf32>
    %147 = arith.divf %145, %146 : vector<8x128xf32>
    %148 = vector.extract_strided_slice %139 {offsets = [0, 128], sizes = [8, 128], strides = [1, 1]} : vector<8x384xf32> to vector<8x128xf32>
    %149 = vector.extract_strided_slice %138 {offsets = [0, 128], sizes = [8, 128], strides = [1, 1]} : vector<8x384xf32> to vector<8x128xf32>
    %150 = arith.addf %148, %149 : vector<8x128xf32>
    %151 = arith.negf %150 : vector<8x128xf32>
    %152 = math.exp %151 : vector<8x128xf32>
    %cst_28 = arith.constant 1.000000e+00 : f32
    %153 = vector.broadcast %cst_28 : f32 to vector<8x128xf32>
    %154 = arith.addf %153, %152 : vector<8x128xf32>
    %155 = arith.divf %153, %154 : vector<8x128xf32>
    %156 = vector.extract_strided_slice %139 {offsets = [0, 256], sizes = [8, 128], strides = [1, 1]} : vector<8x384xf32> to vector<8x128xf32>
    %157 = vector.extract_strided_slice %138 {offsets = [0, 256], sizes = [8, 128], strides = [1, 1]} : vector<8x384xf32> to vector<8x128xf32>
    %158 = vector.broadcast %7 : vector<1x128xf32> to vector<8x128xf32>
    %159 = arith.addf %157, %158 : vector<8x128xf32>
    %160 = arith.mulf %147, %159 : vector<8x128xf32>
    %161 = arith.addf %156, %160 : vector<8x128xf32>
    %162 = math.tanh %161 : vector<8x128xf32>
    %163 = arith.subf %136, %162 : vector<8x128xf32>
    %164 = arith.mulf %155, %163 : vector<8x128xf32>
    %165 = arith.addf %162, %164 : vector<8x128xf32>
    %166 = arith.truncf %165 : vector<8x128xf32> to vector<8x128xbf16>
    %cst_29 = arith.constant dense<0.000000e+00> : vector<8x384xf32>
    %167 = tpu.matmul %166, %2, %cst_29 {dimension_numbers = #tpu.dot_dimension_numbers<[1], [0], [0], [1], [0, 0, 1, 1], [], []>} : vector<8x128xbf16>, vector<128x384xbf16>, vector<8x384xf32> -> vector<8x384xf32>
    %168 = vector.extract_strided_slice %19 {offsets = [40, 0], sizes = [8, 384], strides = [1, 1]} : vector<64x384xf32> to vector<8x384xf32>
    %169 = vector.extract_strided_slice %168 {offsets = [0, 0], sizes = [8, 128], strides = [1, 1]} : vector<8x384xf32> to vector<8x128xf32>
    %170 = vector.extract_strided_slice %167 {offsets = [0, 0], sizes = [8, 128], strides = [1, 1]} : vector<8x384xf32> to vector<8x128xf32>
    %171 = arith.addf %169, %170 : vector<8x128xf32>
    %172 = arith.negf %171 : vector<8x128xf32>
    %173 = math.exp %172 : vector<8x128xf32>
    %cst_30 = arith.constant 1.000000e+00 : f32
    %174 = vector.broadcast %cst_30 : f32 to vector<8x128xf32>
    %175 = arith.addf %174, %173 : vector<8x128xf32>
    %176 = arith.divf %174, %175 : vector<8x128xf32>
    %177 = vector.extract_strided_slice %168 {offsets = [0, 128], sizes = [8, 128], strides = [1, 1]} : vector<8x384xf32> to vector<8x128xf32>
    %178 = vector.extract_strided_slice %167 {offsets = [0, 128], sizes = [8, 128], strides = [1, 1]} : vector<8x384xf32> to vector<8x128xf32>
    %179 = arith.addf %177, %178 : vector<8x128xf32>
    %180 = arith.negf %179 : vector<8x128xf32>
    %181 = math.exp %180 : vector<8x128xf32>
    %cst_31 = arith.constant 1.000000e+00 : f32
    %182 = vector.broadcast %cst_31 : f32 to vector<8x128xf32>
    %183 = arith.addf %182, %181 : vector<8x128xf32>
    %184 = arith.divf %182, %183 : vector<8x128xf32>
    %185 = vector.extract_strided_slice %168 {offsets = [0, 256], sizes = [8, 128], strides = [1, 1]} : vector<8x384xf32> to vector<8x128xf32>
    %186 = vector.extract_strided_slice %167 {offsets = [0, 256], sizes = [8, 128], strides = [1, 1]} : vector<8x384xf32> to vector<8x128xf32>
    %187 = vector.broadcast %7 : vector<1x128xf32> to vector<8x128xf32>
    %188 = arith.addf %186, %187 : vector<8x128xf32>
    %189 = arith.mulf %176, %188 : vector<8x128xf32>
    %190 = arith.addf %185, %189 : vector<8x128xf32>
    %191 = math.tanh %190 : vector<8x128xf32>
    %192 = arith.subf %165, %191 : vector<8x128xf32>
    %193 = arith.mulf %184, %192 : vector<8x128xf32>
    %194 = arith.addf %191, %193 : vector<8x128xf32>
    %195 = arith.truncf %194 : vector<8x128xf32> to vector<8x128xbf16>
    %cst_32 = arith.constant dense<0.000000e+00> : vector<8x384xf32>
    %196 = tpu.matmul %195, %2, %cst_32 {dimension_numbers = #tpu.dot_dimension_numbers<[1], [0], [0], [1], [0, 0, 1, 1], [], []>} : vector<8x128xbf16>, vector<128x384xbf16>, vector<8x384xf32> -> vector<8x384xf32>
    %197 = vector.extract_strided_slice %19 {offsets = [48, 0], sizes = [8, 384], strides = [1, 1]} : vector<64x384xf32> to vector<8x384xf32>
    %198 = vector.extract_strided_slice %197 {offsets = [0, 0], sizes = [8, 128], strides = [1, 1]} : vector<8x384xf32> to vector<8x128xf32>
    %199 = vector.extract_strided_slice %196 {offsets = [0, 0], sizes = [8, 128], strides = [1, 1]} : vector<8x384xf32> to vector<8x128xf32>
    %200 = arith.addf %198, %199 : vector<8x128xf32>
    %201 = arith.negf %200 : vector<8x128xf32>
    %202 = math.exp %201 : vector<8x128xf32>
    %cst_33 = arith.constant 1.000000e+00 : f32
    %203 = vector.broadcast %cst_33 : f32 to vector<8x128xf32>
    %204 = arith.addf %203, %202 : vector<8x128xf32>
    %205 = arith.divf %203, %204 : vector<8x128xf32>
    %206 = vector.extract_strided_slice %197 {offsets = [0, 128], sizes = [8, 128], strides = [1, 1]} : vector<8x384xf32> to vector<8x128xf32>
    %207 = vector.extract_strided_slice %196 {offsets = [0, 128], sizes = [8, 128], strides = [1, 1]} : vector<8x384xf32> to vector<8x128xf32>
    %208 = arith.addf %206, %207 : vector<8x128xf32>
    %209 = arith.negf %208 : vector<8x128xf32>
    %210 = math.exp %209 : vector<8x128xf32>
    %cst_34 = arith.constant 1.000000e+00 : f32
    %211 = vector.broadcast %cst_34 : f32 to vector<8x128xf32>
    %212 = arith.addf %211, %210 : vector<8x128xf32>
    %213 = arith.divf %211, %212 : vector<8x128xf32>
    %214 = vector.extract_strided_slice %197 {offsets = [0, 256], sizes = [8, 128], strides = [1, 1]} : vector<8x384xf32> to vector<8x128xf32>
    %215 = vector.extract_strided_slice %196 {offsets = [0, 256], sizes = [8, 128], strides = [1, 1]} : vector<8x384xf32> to vector<8x128xf32>
    %216 = vector.broadcast %7 : vector<1x128xf32> to vector<8x128xf32>
    %217 = arith.addf %215, %216 : vector<8x128xf32>
    %218 = arith.mulf %205, %217 : vector<8x128xf32>
    %219 = arith.addf %214, %218 : vector<8x128xf32>
    %220 = math.tanh %219 : vector<8x128xf32>
    %221 = arith.subf %194, %220 : vector<8x128xf32>
    %222 = arith.mulf %213, %221 : vector<8x128xf32>
    %223 = arith.addf %220, %222 : vector<8x128xf32>
    %224 = arith.truncf %223 : vector<8x128xf32> to vector<8x128xbf16>
    %cst_35 = arith.constant dense<0.000000e+00> : vector<8x384xf32>
    %225 = tpu.matmul %224, %2, %cst_35 {dimension_numbers = #tpu.dot_dimension_numbers<[1], [0], [0], [1], [0, 0, 1, 1], [], []>} : vector<8x128xbf16>, vector<128x384xbf16>, vector<8x384xf32> -> vector<8x384xf32>
    %226 = vector.extract_strided_slice %19 {offsets = [56, 0], sizes = [8, 384], strides = [1, 1]} : vector<64x384xf32> to vector<8x384xf32>
    %227 = vector.extract_strided_slice %226 {offsets = [0, 0], sizes = [8, 128], strides = [1, 1]} : vector<8x384xf32> to vector<8x128xf32>
    %228 = vector.extract_strided_slice %225 {offsets = [0, 0], sizes = [8, 128], strides = [1, 1]} : vector<8x384xf32> to vector<8x128xf32>
    %229 = arith.addf %227, %228 : vector<8x128xf32>
    %230 = arith.negf %229 : vector<8x128xf32>
    %231 = math.exp %230 : vector<8x128xf32>
    %cst_36 = arith.constant 1.000000e+00 : f32
    %232 = vector.broadcast %cst_36 : f32 to vector<8x128xf32>
    %233 = arith.addf %232, %231 : vector<8x128xf32>
    %234 = arith.divf %232, %233 : vector<8x128xf32>
    %235 = vector.extract_strided_slice %226 {offsets = [0, 128], sizes = [8, 128], strides = [1, 1]} : vector<8x384xf32> to vector<8x128xf32>
    %236 = vector.extract_strided_slice %225 {offsets = [0, 128], sizes = [8, 128], strides = [1, 1]} : vector<8x384xf32> to vector<8x128xf32>
    %237 = arith.addf %235, %236 : vector<8x128xf32>
    %238 = arith.negf %237 : vector<8x128xf32>
    %239 = math.exp %238 : vector<8x128xf32>
    %cst_37 = arith.constant 1.000000e+00 : f32
    %240 = vector.broadcast %cst_37 : f32 to vector<8x128xf32>
    %241 = arith.addf %240, %239 : vector<8x128xf32>
    %242 = arith.divf %240, %241 : vector<8x128xf32>
    %243 = vector.extract_strided_slice %226 {offsets = [0, 256], sizes = [8, 128], strides = [1, 1]} : vector<8x384xf32> to vector<8x128xf32>
    %244 = vector.extract_strided_slice %225 {offsets = [0, 256], sizes = [8, 128], strides = [1, 1]} : vector<8x384xf32> to vector<8x128xf32>
    %245 = vector.broadcast %7 : vector<1x128xf32> to vector<8x128xf32>
    %246 = arith.addf %244, %245 : vector<8x128xf32>
    %247 = arith.mulf %234, %246 : vector<8x128xf32>
    %248 = arith.addf %243, %247 : vector<8x128xf32>
    %249 = math.tanh %248 : vector<8x128xf32>
    %250 = arith.subf %223, %249 : vector<8x128xf32>
    %251 = arith.mulf %242, %250 : vector<8x128xf32>
    %252 = arith.addf %249, %251 : vector<8x128xf32>
    %253 = vector.extract_strided_slice %29 {offsets = [0, 0], sizes = [8, 128], strides = [1, 1]} : vector<8x384xf32> to vector<8x128xf32>
    %254 = arith.negf %253 : vector<8x128xf32>
    %255 = math.exp %254 : vector<8x128xf32>
    %cst_38 = arith.constant 1.000000e+00 : f32
    %256 = vector.broadcast %cst_38 : f32 to vector<8x128xf32>
    %257 = arith.addf %256, %255 : vector<8x128xf32>
    %258 = arith.divf %256, %257 : vector<8x128xf32>
    %259 = vector.extract_strided_slice %29 {offsets = [0, 128], sizes = [8, 128], strides = [1, 1]} : vector<8x384xf32> to vector<8x128xf32>
    %260 = arith.negf %259 : vector<8x128xf32>
    %261 = math.exp %260 : vector<8x128xf32>
    %cst_39 = arith.constant 1.000000e+00 : f32
    %262 = vector.broadcast %cst_39 : f32 to vector<8x128xf32>
    %263 = arith.addf %262, %261 : vector<8x128xf32>
    %264 = arith.divf %262, %263 : vector<8x128xf32>
    %265 = vector.extract_strided_slice %29 {offsets = [0, 256], sizes = [8, 128], strides = [1, 1]} : vector<8x384xf32> to vector<8x128xf32>
    %266 = vector.broadcast %8 : vector<1x128xf32> to vector<8x128xf32>
    %267 = arith.mulf %258, %266 : vector<8x128xf32>
    %268 = arith.addf %265, %267 : vector<8x128xf32>
    %269 = math.tanh %268 : vector<8x128xf32>
    %270 = arith.mulf %264, %269 : vector<8x128xf32>
    %271 = arith.subf %269, %270 : vector<8x128xf32>
    %272 = arith.truncf %252 : vector<8x128xf32> to vector<8x128xbf16>
    %cst_40 = arith.constant dense<0.000000e+00> : vector<8x384xf32>
    %273 = tpu.matmul %272, %3, %cst_40 {dimension_numbers = #tpu.dot_dimension_numbers<[1], [0], [0], [1], [0, 0, 1, 1], [], []>} : vector<8x128xbf16>, vector<128x384xbf16>, vector<8x384xf32> -> vector<8x384xf32>
    %274 = arith.truncf %271 : vector<8x128xf32> to vector<8x128xbf16>
    %cst_41 = arith.constant dense<0.000000e+00> : vector<8x384xf32>
    %275 = tpu.matmul %274, %4, %cst_41 {dimension_numbers = #tpu.dot_dimension_numbers<[1], [0], [0], [1], [0, 0, 1, 1], [], []>} : vector<8x128xbf16>, vector<128x384xbf16>, vector<8x384xf32> -> vector<8x384xf32>
    %276 = arith.addf %273, %275 : vector<8x384xf32>
    %277 = vector.broadcast %9 : vector<1x384xf32> to vector<8x384xf32>
    %278 = arith.addf %276, %277 : vector<8x384xf32>
    %279 = vector.extract_strided_slice %278 {offsets = [0, 0], sizes = [2, 4], strides = [1, 1]} : vector<8x384xf32> to vector<2x4xf32>
    %c0_42 = arith.constant 0 : index
    %c0_43 = arith.constant 0 : index
    %280 = vector.load %arg3[%c0_42, %c0_43] : memref<2x4xf32, #tpu.memory_space<vmem>>, vector<2x4xf32>
    tpu.vector_store %arg3[%c0_42, %c0_43], %279 {strides = array<i32>} : memref<2x4xf32, #tpu.memory_space<vmem>>, vector<2x4xf32>,
    return
  }
}

</mosaic_0001>

<llo_original>
// kernel: _fwd.1
$region0: #{_fwd.1}
  #allocation0 [shape = 'u32[]', space=smem, size = 0x4, offset = 0x4, fixed_abs, tag = 'smem constant byte address 0x4 - core index']
  #allocation1 [shape = 'u32[144,128]{1,0:T(1,128)}', space=vmem, size = 0x12000, scoped, tag = 'internal scratch']
  %s0 = inlined_call_operand.vmem [shape: s32[64,1], index: 0, kind: input, shape index: {}]
  %s1 = inlined_call_operand.hbm [shape: bf16[448,384], index: 1, kind: input, shape index: {}]
  %s2 = inlined_call_operand.vmem [shape: f32[8,384], index: 2, kind: input, shape index: {}]
  %s3 = inlined_call_operand.hbm [shape: f32[2,4], index: 3, kind: output, shape index: {}]
  %s4 = sld [smem:[#allocation0]]
  $region26: #{_fwd.1} parent=0
    _
  %s6 = ssub.s32 1, %s4
  %s7 = scalar_select 0, %s6, %s4
  $region1: #{_fwd.1} parent=0
    #allocation2 [shape = 'u8[344064]{0}', space=vmem, size = 0x54000, scoped, tag = 'input window, operand 1, single buffered']
    #allocation3 [shape = 's32[1]{0}', space=sflag, size = 0x4, scoped, tag = 'scoped memory for _fwd.1']
    #allocation4 [shape = 's32[1]{0}', space=sflag, size = 0x4, scoped, tag = 'scoped memory for _fwd.1']
    #allocation5 [shape = 'u8[1024]{0}', space=vmem, size = 0x400, scoped, tag = 'output window, operand 0, single buffered']
    %8 = vsyncpa [#allocation3], 0
    %9 = vsyncpa [#allocation4], 0
    // Predicated region
    $region2: #{_fwd.1} parent=1 // pred_check
      _
    $region3: #{_fwd.1} parent=1 // pred_check_branch
      %11 = sbr.rel (0) target = $region5
    $region4: #{_fwd.1} parent=1 // pred_region
      _
    $region5: #{_fwd.1} parent=1 // pred_fallthru
      _
    // Predicated region
    $region6: #{_fwd.1} parent=1 // pred_check
      _
    $region7: #{_fwd.1} parent=1 // pred_check_branch
      %13 = sbr.rel (0) target = $region9
    $region8: #{_fwd.1} parent=1 // pred_region
      %s15 = ssub.s32 10752, 10752
      %16 = vsyncadd [#allocation3], %s15
      %s17 = sshll.u32 [#allocation2], 4
      %s18 = int_to_ptr.vmem [resolvable:$true] %s17
      %23 = dma.hbm_to_vmem [thread:$0]  %s1, 10752, %s18, [#allocation3], 192, 192, 12
    $region9: #{_fwd.1} parent=1 // pred_fallthru
      _
    // Predicated region
    $region10: #{_fwd.1} parent=1 // pred_check
      _
    $region11: #{_fwd.1} parent=1 // pred_check_branch
      %25 = sbr.rel (0) target = $region13
    $region12: #{_fwd.1} parent=1 // pred_region
      _
    $region13: #{_fwd.1} parent=1 // pred_fallthru
      _
    // Predicated region
    $region14: #{_fwd.1} parent=1 // pred_check
      _
    $region15: #{_fwd.1} parent=1 // pred_check_branch
      %27 = sbr.rel (0) target = $region17
    $region16: #{_fwd.1} parent=1 // pred_region
      %28 = dma.done [#allocation3], 10752
    $region17: #{_fwd.1} parent=1 // pred_fallthru
      _
    %v30 = vld [vmem:[#allocation2] sm:$0xff]
    %v31 = vld [vmem:[#allocation2 + $0x8] sm:$0xf]
    %v32 = vld [vmem:[#allocation2 + $0xc] sm:$0xff]
    %v33 = vld [vmem:[#allocation2 + $0x14] sm:$0xf]
    %v34 = vld [vmem:[#allocation2 + $0x18] sm:$0xff]
    %v35 = vld [vmem:[#allocation2 + $0x20] sm:$0xf]
    %v36 = vld [vmem:[#allocation2 + $0x24] sm:$0xff]
    %v37 = vld [vmem:[#allocation2 + $0x2c] sm:$0xf]
    %v38 = vld [vmem:[#allocation2 + $0x30] sm:$0xff]
    %v39 = vld [vmem:[#allocation2 + $0x38] sm:$0xf]
    %v40 = vld [vmem:[#allocation2 + $0x3c] sm:$0xff]
    %v41 = vld [vmem:[#allocation2 + $0x44] sm:$0xf]
    %v42 = vld [vmem:[#allocation2 + $0x48] sm:$0xff]
    %v43 = vld [vmem:[#allocation2 + $0x50] sm:$0xf]
    %v44 = vld [vmem:[#allocation2 + $0x54] sm:$0xff]
    %v45 = vld [vmem:[#allocation2 + $0x5c] sm:$0xf]
    %v46 = vld [vmem:[#allocation2 + $0x60] sm:$0xff]
    %v47 = vld [vmem:[#allocation2 + $0x68] sm:$0xf]
    %v48 = vld [vmem:[#allocation2 + $0x6c] sm:$0xff]
    %v49 = vld [vmem:[#allocation2 + $0x74] sm:$0xf]
    %v50 = vld [vmem:[#allocation2 + $0x78] sm:$0xff]
    %v51 = vld [vmem:[#allocation2 + $0x80] sm:$0xf]
    %v52 = vld [vmem:[#allocation2 + $0x84] sm:$0xff]
    %v53 = vld [vmem:[#allocation2 + $0x8c] sm:$0xf]
    %v54 = vld [vmem:[#allocation2 + $0x90] sm:$0xff]
    %v55 = vld [vmem:[#allocation2 + $0x98] sm:$0xf]
    %v56 = vld [vmem:[#allocation2 + $0x9c] sm:$0xff]
    %v57 = vld [vmem:[#allocation2 + $0xa4] sm:$0xf]
    %v58 = vld [vmem:[#allocation2 + $0xa8] sm:$0xff]
    %v59 = vld [vmem:[#allocation2 + $0xb0] sm:$0xf]
    %v60 = vld [vmem:[#allocation2 + $0xb4] sm:$0xff]
    %v61 = vld [vmem:[#allocation2 + $0xbc] sm:$0xf]
    %v62 = vld [vmem:[#allocation2 + $0xc0] sm:$0xff]
    %v63 = vld [vmem:[#allocation2 + $0xc8] sm:$0xf]
    %v64 = vld [vmem:[#allocation2 + $0xcc] sm:$0xff]
    %v65 = vld [vmem:[#allocation2 + $0xd4] sm:$0xf]
    %v66 = vld [vmem:[#allocation2 + $0xd8] sm:$0xff]
    %v67 = vld [vmem:[#allocation2 + $0xe0] sm:$0xf]
    %v68 = vld [vmem:[#allocation2 + $0xe4] sm:$0xff]
    %v69 = vld [vmem:[#allocation2 + $0xec] sm:$0xf]
    %v70 = vld [vmem:[#allocation2 + $0xf0] sm:$0xff]
    %v71 = vld [vmem:[#allocation2 + $0xf8] sm:$0xf]
    %v72 = vld [vmem:[#allocation2 + $0xfc] sm:$0xff]
    %v73 = vld [vmem:[#allocation2 + $0x104] sm:$0xf]
    %v74 = vld [vmem:[#allocation2 + $0x108] sm:$0xff]
    %v75 = vld [vmem:[#allocation2 + $0x110] sm:$0xf]
    %v76 = vld [vmem:[#allocation2 + $0x114] sm:$0xff]
    %v77 = vld [vmem:[#allocation2 + $0x11c] sm:$0xf]
    %v78 = vld [vmem:[#allocation2 + $0x120] sm:$0xff]
    %v79 = vld [vmem:[#allocation2 + $0x12c] sm:$0xff]
    %v80 = vld [vmem:[#allocation2 + $0x138] sm:$0xff]
    %v81 = vld [vmem:[#allocation2 + $0x144] sm:$0xff]
    %v82 = vld [vmem:[#allocation2 + $0x150] sm:$0xff]
    %v83 = vld [vmem:[#allocation2 + $0x15c] sm:$0xff]
    %v84 = vld [vmem:[#allocation2 + $0x168] sm:$0xff]
    %v85 = vld [vmem:[#allocation2 + $0x174] sm:$0xff]
    %v86 = vld [vmem:[#allocation2 + $0x180] sm:$0xff]
    %v87 = vld [vmem:[#allocation2 + $0x18c] sm:$0xff]
    %v88 = vld [vmem:[#allocation2 + $0x198] sm:$0xff]
    %v89 = vld [vmem:[#allocation2 + $0x1a4] sm:$0xff]
    %v90 = vld [vmem:[#allocation2 + $0x1b0] sm:$0xff]
    %v91 = vld [vmem:[#allocation2 + $0x1bc] sm:$0xff]
    %v92 = vld [vmem:[#allocation2 + $0x1c8] sm:$0xff]
    %v93 = vld [vmem:[#allocation2 + $0x1d4] sm:$0xff]
    %v94 = vld [vmem:[#allocation2 + $0x1e0] sm:$0xff]
    %v95 = vld [vmem:[#allocation2 + $0x1ec] sm:$0xff]
    %v96 = vld [vmem:[#allocation2 + $0x1f8] sm:$0xff]
    %v97 = vld [vmem:[#allocation2 + $0x204] sm:$0xff]
    %v98 = vld [vmem:[#allocation2 + $0x210] sm:$0xff]
    %v99 = vld [vmem:[#allocation2 + $0x21c] sm:$0xff]
    %v100 = vld [vmem:[#allocation2 + $0x228] sm:$0xff]
    %v101 = vld [vmem:[#allocation2 + $0x234] sm:$0xff]
    %v102 = vld [vmem:[#allocation2 + $0x240] sm:$0xff]
    %v103 = vld [vmem:[#allocation2 + $0x24c] sm:$0xff]
    %v104 = vld [vmem:[#allocation2 + $0x258] sm:$0xff]
    %v105 = vld [vmem:[#allocation2 + $0x264] sm:$0xff]
    %v106 = vld [vmem:[#allocation2 + $0x270] sm:$0xff]
    %v107 = vld [vmem:[#allocation2 + $0x27c] sm:$0xff]
    %v108 = vld [vmem:[#allocation2 + $0x288] sm:$0xff]
    %v109 = vld [vmem:[#allocation2 + $0x294] sm:$0xff]
    %v110 = vld [vmem:[%s2] ss:$8 sm:$0x7]
    %s111 = scalar_lea.vmem %s2, 1
    %v112 = vld [vmem:[%s111] ss:$8 sm:$0x7]
    %v113 = vld [vmem:[%s2 + $0x2] ss:$0 sm:$0xff]
    %v114 = vld [vmem:[%s2 + $0x3] ss:$0 sm:$0xff]
    %s115 = scalar_lea.vmem %s2, 4
    %v116 = vld [vmem:[%s115] ss:$8 sm:$0x7]
    %v117 = vld [vmem:[%s0] sm:$0xff]
    %v118 = vld [vmem:[%s0 + $0x8] sm:$0xff]
    %v119 = vld [vmem:[%s0 + $0x10] sm:$0xff]
    %v120 = vld [vmem:[%s0 + $0x18] sm:$0xff]
    %v121 = vld [vmem:[%s0 + $0x20] sm:$0xff]
    %v122 = vld [vmem:[%s0 + $0x28] sm:$0xff]
    %v123 = vld [vmem:[%s0 + $0x30] sm:$0xff]
    %v124 = vld [vmem:[%s0 + $0x38] sm:$0xff]
    %v125 = vlaneseq
    %v126 = vand.u32 %v125, 127
    %127 = vset.pattern.permute.xlu0 0
    %128 = vperm.xlu0 %127, %v117
    %v129 = vpop.permute.xlu0 %128
    %130 = vset.pattern.permute.xlu0 0
    %131 = vperm.xlu0 %130, %v118
    %v132 = vpop.permute.xlu0 %131
    %133 = vset.pattern.permute.xlu0 0
    %134 = vperm.xlu0 %133, %v119
    %v135 = vpop.permute.xlu0 %134
    %136 = vset.pattern.permute.xlu0 0
    %137 = vperm.xlu0 %136, %v120
    %v138 = vpop.permute.xlu0 %137
    %139 = vset.pattern.permute.xlu0 0
    %140 = vperm.xlu0 %139, %v121
    %v141 = vpop.permute.xlu0 %140
    %142 = vset.pattern.permute.xlu0 0
    %143 = vperm.xlu0 %142, %v122
    %v144 = vpop.permute.xlu0 %143
    %145 = vset.pattern.permute.xlu0 0
    %146 = vperm.xlu0 %145, %v123
    %v147 = vpop.permute.xlu0 %146
    %148 = vset.pattern.permute.xlu0 0
    %149 = vperm.xlu0 %148, %v124
    %v150 = vpop.permute.xlu0 %149
    %vm151 = vcmp.eq.s32.totalorder %v129, %v126
    %vm152 = vcmp.eq.s32.totalorder %v132, %v126
    %vm153 = vcmp.eq.s32.totalorder %v135, %v126
    %vm154 = vcmp.eq.s32.totalorder %v138, %v126
    %vm155 = vcmp.eq.s32.totalorder %v141, %v126
    %vm156 = vcmp.eq.s32.totalorder %v144, %v126
    %vm157 = vcmp.eq.s32.totalorder %v147, %v126
    %vm158 = vcmp.eq.s32.totalorder %v150, %v126
    %v159 = vsel %vm151, 1, 0
    %v160 = vsel %vm152, 1, 0
    %v161 = vsel %vm153, 1, 0
    %v162 = vsel %vm154, 1, 0
    %v163 = vsel %vm155, 1, 0
    %v164 = vsel %vm156, 1, 0
    %v165 = vsel %vm157, 1, 0
    %v166 = vsel %vm158, 1, 0
    %v167 = vcvt.s32.f32 %v159
    %v168 = vcvt.s32.f32 %v160
    %v169 = vcvt.s32.f32 %v161
    %v170 = vcvt.s32.f32 %v162
    %v171 = vcvt.s32.f32 %v163
    %v172 = vcvt.s32.f32 %v164
    %v173 = vcvt.s32.f32 %v165
    %v174 = vcvt.s32.f32 %v166
    %v175 = vpack.c.bf16 %v168, %v167
    %v176 = vpack.c.bf16 %v170, %v169
    %v177 = vpack.c.bf16 %v172, %v171
    %v178 = vpack.c.bf16 %v174, %v173
    %v180 = vlaneseq
    %v181 = vshrl.u32 %v180, 7
    %v182 = vsub.s32 0, %v181
    %v183 = vrot.slane %v110, %v182
    %v184 = vlaneseq
    %v185 = vshrl.u32 %v184, 7
    %v186 = vsub.s32 1, %v185
    %v187 = vrot.slane %v110, %v186
    %v188 = vlaneseq
    %v189 = vshrl.u32 %v188, 7
    %v190 = vsub.s32 2, %v189
    %v191 = vrot.slane %v110, %v190
    %v203 = vunpack.c.l.b16 %v30
    %v204 = vunpack.c.h.b16 %v30
    %v205 = vunpack.c.l.b16 %v31
    %v206 = vunpack.c.l.b16 %v32
    %v207 = vunpack.c.h.b16 %v32
    %v208 = vunpack.c.l.b16 %v33
    %v209 = vunpack.c.l.b16 %v34
    %v210 = vunpack.c.h.b16 %v34
    %v211 = vunpack.c.l.b16 %v35
    %v212 = vunpack.c.l.b16 %v36
    %v213 = vunpack.c.h.b16 %v36
    %v214 = vunpack.c.l.b16 %v37
    %v215 = vpack.c.b16 %v206, %v203
    %v216 = vpack.c.b16 %v207, %v204
    %v217 = vpack.c.b16 %v208, %v205
    %v218 = vpack.c.b16 %v212, %v209
    %v219 = vpack.c.b16 %v213, %v210
    %v220 = vpack.c.b16 %v214, %v211
    %vm227 = vcmask 261120
    %v229 = vsel %vm227, %v175, 0
    %v232 = vsel %vm227, %v176, 0
    %v235 = vsel %vm227, %v177, 0
    %v238 = vsel %vm227, %v178, 0
    %240 = vmatprep.subr.bf16.mxu0 0
    %241 = vmatpush1.bf16.msra.mxu0 0
    %242 = vmatprep.subr.bf16.mxu0 0
    %243 = vmatpush1.bf16.msra.mxu0 0
    %244 = vmatprep.subr.bf16.mxu0 0
    %245 = vmatpush1.bf16.msra.mxu0 0
    %246 = vmatprep.subr.bf16.mxu0 0
    %247 = vmatpush1.bf16.msra.mxu0 0
    %248 = vmatprep.subr.bf16.mxu0 0
    %249 = vmatpush1.bf16.msra.mxu0 0
    %250 = vmatprep.subr.bf16.mxu0 0
    %251 = vmatpush1.bf16.msra.mxu0 0
    %252 = vmatprep.subr.bf16.mxu0 %v219
    %253 = vmatpush1.bf16.msra.mxu0 %v218
    %254 = vmatprep.subr.bf16.mxu0 %v216
    %255 = vmatpush1.bf16.msra.mxu0 %v215
    %256 = vmatprep.subr.bf16.mxu0 0
    %257 = vmatpush2.bf16.msra.mxu0 0
    %258 = vmatprep.subr.bf16.mxu0 0
    %259 = vmatpush2.bf16.msra.mxu0 0
    %260 = vmatprep.subr.bf16.mxu0 0
    %261 = vmatpush2.bf16.msra.mxu0 0
    %262 = vmatprep.subr.bf16.mxu0 0
    %263 = vmatpush2.bf16.msra.mxu0 0
    %264 = vmatprep.subr.bf16.mxu0 0
    %265 = vmatpush2.bf16.msra.mxu0 0
    %266 = vmatprep.subr.bf16.mxu0 0
    %267 = vmatpush2.bf16.msra.mxu0 0
    %268 = vmatprep.subr.bf16.mxu0 0
    %269 = vmatpush2.bf16.msra.mxu0 0
    %270 = vmatprep.subr.bf16.mxu0 0
    %271 = vmatpush2.bf16.msra.mxu0 0
    %272 = vmatprep.mubr.bf16.mxu0 0
    %273 = vmatmul.mubr.bf16.gmra.mxu0 %v229
    %v274 = vpop.f32.mrf.mxu0
    %v275 = vadd.f32 %v183, %v274
    %v276 = vpop.f32.mrf.mxu0
    %v277 = vadd.f32 %v187, %v276
    %v278 = vpop.f32.mrf.mxu0
    %v279 = vadd.f32 %v183, %v278
    %v280 = vpop.f32.mrf.mxu0
    %v281 = vadd.f32 %v187, %v280
    %282 = vmatprep.mubr.bf16.mxu0 0
    %283 = vmatmul.mubr.bf16.gmra.mxu0 %v232
    %v284 = vpop.f32.mrf.mxu0
    %v285 = vadd.f32 %v183, %v284
    %v286 = vpop.f32.mrf.mxu0
    %v287 = vadd.f32 %v187, %v286
    %v288 = vpop.f32.mrf.mxu0
    %v289 = vadd.f32 %v183, %v288
    %v290 = vpop.f32.mrf.mxu0
    %v291 = vadd.f32 %v187, %v290
    %292 = vmatprep.mubr.bf16.mxu0 0
    %293 = vmatmul.mubr.bf16.gmra.mxu0 %v235
    %v294 = vpop.f32.mrf.mxu0
    %v295 = vadd.f32 %v183, %v294
    %v296 = vpop.f32.mrf.mxu0
    %v297 = vadd.f32 %v187, %v296
    %v298 = vpop.f32.mrf.mxu0
    %v299 = vadd.f32 %v183, %v298
    %v300 = vpop.f32.mrf.mxu0
    %v301 = vadd.f32 %v187, %v300
    %302 = vmatprep.mubr.bf16.mxu0 0
    %303 = vmatmul.mubr.bf16.gmra.mxu0 %v238
    %v304 = vpop.f32.mrf.mxu0
    %v305 = vadd.f32 %v183, %v304
    %v306 = vpop.f32.mrf.mxu0
    %v307 = vadd.f32 %v187, %v306
    %v308 = vpop.f32.mrf.mxu0
    %v309 = vadd.f32 %v183, %v308
    %v310 = vpop.f32.mrf.mxu0
    %v311 = vadd.f32 %v187, %v310
    %312 = vdwg.mxu0
    %313 = vmatprep.subr.bf16.mxu0 0
    %314 = vmatpush1.bf16.msra.mxu0 0
    %315 = vmatprep.subr.bf16.mxu0 0
    %316 = vmatpush1.bf16.msra.mxu0 0
    %317 = vmatprep.subr.bf16.mxu0 0
    %318 = vmatpush1.bf16.msra.mxu0 0
    %319 = vmatprep.subr.bf16.mxu0 0
    %320 = vmatpush1.bf16.msra.mxu0 0
    %321 = vmatprep.subr.bf16.mxu0 0
    %322 = vmatpush1.bf16.msra.mxu0 0
    %323 = vmatprep.subr.bf16.mxu0 0
    %324 = vmatpush1.bf16.msra.mxu0 0
    %325 = vmatprep.subr.bf16.mxu0 0
    %326 = vmatpush1.bf16.msra.mxu0 %v220
    %327 = vmatprep.subr.bf16.mxu0 0
    %328 = vmatpush1.bf16.msra.mxu0 %v217
    %329 = vmatprep.subr.bf16.mxu0 0
    %330 = vmatpush2.bf16.msra.mxu0 0
    %331 = vmatprep.subr.bf16.mxu0 0
    %332 = vmatpush2.bf16.msra.mxu0 0
    %333 = vmatprep.subr.bf16.mxu0 0
    %334 = vmatpush2.bf16.msra.mxu0 0
    %335 = vmatprep.subr.bf16.mxu0 0
    %336 = vmatpush2.bf16.msra.mxu0 0
    %337 = vmatprep.subr.bf16.mxu0 0
    %338 = vmatpush2.bf16.msra.mxu0 0
    %339 = vmatprep.subr.bf16.mxu0 0
    %340 = vmatpush2.bf16.msra.mxu0 0
    %341 = vmatprep.subr.bf16.mxu0 0
    %342 = vmatpush2.bf16.msra.mxu0 0
    %343 = vmatprep.subr.bf16.mxu0 0
    %344 = vmatpush2.bf16.msra.mxu0 0
    %345 = vmatprep.mubr.bf16.mxu0 0
    %346 = vmatmul.mubr.bf16.gmra.mxu0 %v229
    %v347 = vpop.f32.mrf.mxu0
    %v348 = vadd.f32 %v191, %v347
    %v349 = vpop.f32.mrf.mxu0
    %v350 = vpop.f32.mrf.mxu0
    %v351 = vadd.f32 %v191, %v350
    %v352 = vpop.f32.mrf.mxu0
    %353 = vmatprep.mubr.bf16.mxu0 0
    %354 = vmatmul.mubr.bf16.gmra.mxu0 %v232
    %v355 = vpop.f32.mrf.mxu0
    %v356 = vadd.f32 %v191, %v355
    %v357 = vpop.f32.mrf.mxu0
    %v358 = vpop.f32.mrf.mxu0
    %v359 = vadd.f32 %v191, %v358
    %v360 = vpop.f32.mrf.mxu0
    %361 = vmatprep.mubr.bf16.mxu0 0
    %362 = vmatmul.mubr.bf16.gmra.mxu0 %v235
    %v363 = vpop.f32.mrf.mxu0
    %v364 = vadd.f32 %v191, %v363
    %v365 = vpop.f32.mrf.mxu0
    %v366 = vpop.f32.mrf.mxu0
    %v367 = vadd.f32 %v191, %v366
    %v368 = vpop.f32.mrf.mxu0
    %369 = vmatprep.mubr.bf16.mxu0 0
    %370 = vmatmul.mubr.bf16.gmra.mxu0 %v238
    %v371 = vpop.f32.mrf.mxu0
    %v372 = vadd.f32 %v191, %v371
    %v373 = vpop.f32.mrf.mxu0
    %v374 = vpop.f32.mrf.mxu0
    %v375 = vadd.f32 %v191, %v374
    %v376 = vpop.f32.mrf.mxu0
    %377 = vdwg.mxu0
    %v378 = vpack.c.bf16 %v174, %v174
    %v380 = vlaneseq
    %v381 = vshrl.u32 %v380, 7
    %v382 = vsub.s32 0, %v381
    %v383 = vrot.slane %v112, %v382
    %v384 = vlaneseq
    %v385 = vshrl.u32 %v384, 7
    %v386 = vsub.s32 1, %v385
    %v387 = vrot.slane %v112, %v386
    %v388 = vlaneseq
    %v389 = vshrl.u32 %v388, 7
    %v390 = vsub.s32 2, %v389
    %v391 = vrot.slane %v112, %v390
    %v403 = vunpack.c.l.b16 %v38
    %v404 = vunpack.c.h.b16 %v38
    %v405 = vunpack.c.l.b16 %v39
    %v406 = vunpack.c.l.b16 %v40
    %v407 = vunpack.c.h.b16 %v40
    %v408 = vunpack.c.l.b16 %v41
    %v409 = vunpack.c.l.b16 %v42
    %v410 = vunpack.c.h.b16 %v42
    %v411 = vunpack.c.l.b16 %v43
    %v412 = vunpack.c.l.b16 %v44
    %v413 = vunpack.c.h.b16 %v44
    %v414 = vunpack.c.l.b16 %v45
    %v415 = vpack.c.b16 %v406, %v403
    %v416 = vpack.c.b16 %v407, %v404
    %v417 = vpack.c.b16 %v408, %v405
    %v418 = vpack.c.b16 %v412, %v409
    %v419 = vpack.c.b16 %v413, %v410
    %v420 = vpack.c.b16 %v414, %v411
    %v428 = vsel %vm227, %v378, 0
    %430 = vmatprep.subr.bf16.mxu0 0
    %431 = vmatpush1.bf16.msra.mxu0 0
    %432 = vmatprep.subr.bf16.mxu0 0
    %433 = vmatpush1.bf16.msra.mxu0 0
    %434 = vmatprep.subr.bf16.mxu0 0
    %435 = vmatpush1.bf16.msra.mxu0 0
    %436 = vmatprep.subr.bf16.mxu0 0
    %437 = vmatpush1.bf16.msra.mxu0 0
    %438 = vmatprep.subr.bf16.mxu0 0
    %439 = vmatpush1.bf16.msra.mxu0 0
    %440 = vmatprep.subr.bf16.mxu0 0
    %441 = vmatpush1.bf16.msra.mxu0 0
    %442 = vmatprep.subr.bf16.mxu0 %v419
    %443 = vmatpush1.bf16.msra.mxu0 %v418
    %444 = vmatprep.subr.bf16.mxu0 %v416
    %445 = vmatpush1.bf16.msra.mxu0 %v415
    %446 = vmatprep.subr.bf16.mxu0 0
    %447 = vmatpush2.bf16.msra.mxu0 0
    %448 = vmatprep.subr.bf16.mxu0 0
    %449 = vmatpush2.bf16.msra.mxu0 0
    %450 = vmatprep.subr.bf16.mxu0 0
    %451 = vmatpush2.bf16.msra.mxu0 0
    %452 = vmatprep.subr.bf16.mxu0 0
    %453 = vmatpush2.bf16.msra.mxu0 0
    %454 = vmatprep.subr.bf16.mxu0 0
    %455 = vmatpush2.bf16.msra.mxu0 0
    %456 = vmatprep.subr.bf16.mxu0 0
    %457 = vmatpush2.bf16.msra.mxu0 0
    %458 = vmatprep.subr.bf16.mxu0 0
    %459 = vmatpush2.bf16.msra.mxu0 0
    %460 = vmatprep.subr.bf16.mxu0 0
    %461 = vmatpush2.bf16.msra.mxu0 0
    %462 = vmatprep.mubr.bf16.mxu0 0
    %463 = vmatmul.mubr.bf16.gmra.mxu0 %v428
    %v464 = vpop.f32.mrf.mxu0
    %v465 = vadd.f32 %v383, %v464
    %v466 = vpop.f32.mrf.mxu0
    %v467 = vadd.f32 %v387, %v466
    %v468 = vpop.f32.mrf.mxu0
    %v469 = vpop.f32.mrf.mxu0
    %470 = vdwg.mxu0
    %471 = vmatprep.subr.bf16.mxu0 0
    %472 = vmatpush1.bf16.msra.mxu0 0
    %473 = vmatprep.subr.bf16.mxu0 0
    %474 = vmatpush1.bf16.msra.mxu0 0
    %475 = vmatprep.subr.bf16.mxu0 0
    %476 = vmatpush1.bf16.msra.mxu0 0
    %477 = vmatprep.subr.bf16.mxu0 0
    %478 = vmatpush1.bf16.msra.mxu0 0
    %479 = vmatprep.subr.bf16.mxu0 0
    %480 = vmatpush1.bf16.msra.mxu0 0
    %481 = vmatprep.subr.bf16.mxu0 0
    %482 = vmatpush1.bf16.msra.mxu0 0
    %483 = vmatprep.subr.bf16.mxu0 0
    %484 = vmatpush1.bf16.msra.mxu0 %v420
    %485 = vmatprep.subr.bf16.mxu0 0
    %486 = vmatpush1.bf16.msra.mxu0 %v417
    %487 = vmatprep.subr.bf16.mxu0 0
    %488 = vmatpush2.bf16.msra.mxu0 0
    %489 = vmatprep.subr.bf16.mxu0 0
    %490 = vmatpush2.bf16.msra.mxu0 0
    %491 = vmatprep.subr.bf16.mxu0 0
    %492 = vmatpush2.bf16.msra.mxu0 0
    %493 = vmatprep.subr.bf16.mxu0 0
    %494 = vmatpush2.bf16.msra.mxu0 0
    %495 = vmatprep.subr.bf16.mxu0 0
    %496 = vmatpush2.bf16.msra.mxu0 0
    %497 = vmatprep.subr.bf16.mxu0 0
    %498 = vmatpush2.bf16.msra.mxu0 0
    %499 = vmatprep.subr.bf16.mxu0 0
    %500 = vmatpush2.bf16.msra.mxu0 0
    %501 = vmatprep.subr.bf16.mxu0 0
    %502 = vmatpush2.bf16.msra.mxu0 0
    %503 = vmatprep.mubr.bf16.mxu0 0
    %504 = vmatmul.mubr.bf16.gmra.mxu0 %v428
    %v505 = vpop.f32.mrf.mxu0
    %v506 = vadd.f32 %v391, %v505
    %v507 = vpop.f32.mrf.mxu0
    %v508 = vpop.f32.mrf.mxu0
    %v509 = vpop.f32.mrf.mxu0
    %510 = vdwg.mxu0
    %v511 = vxor.u32 %v275, 2147483648
    %v512 = vmul.f32 %v511, 1.442695
    %v513 = vpow.pop %v512
    %v514 = vadd.f32 %v513, 1.0
    %v515 = vrcp.pop %v514
    %v516 = vmul.f32 1.0, %v515
    %v517 = vxor.u32 %v277, 2147483648
    %v518 = vmul.f32 %v517, 1.442695
    %v519 = vpow.pop %v518
    %v520 = vadd.f32 %v519, 1.0
    %v521 = vrcp.pop %v520
    %v522 = vmul.f32 1.0, %v521
    %v523 = vmul.f32 %v516, %v113
    %v524 = vadd.f32 %v348, %v523
    %v525 = vtanh.pop %v524
    %v526 = vmul.f32 %v522, %v525
    %v527 = vsub.f32 %v525, %v526
    %v528 = vpack.c.bf16 %v527, %v527
    %v561 = vunpack.c.l.b16 %v46
    %v562 = vunpack.c.h.b16 %v46
    %v563 = vunpack.c.l.b16 %v47
    %v564 = vunpack.c.l.b16 %v48
    %v565 = vunpack.c.h.b16 %v48
    %v566 = vunpack.c.l.b16 %v49
    %v567 = vunpack.c.l.b16 %v50
    %v568 = vunpack.c.h.b16 %v50
    %v569 = vunpack.c.l.b16 %v51
    %v570 = vunpack.c.l.b16 %v52
    %v571 = vunpack.c.h.b16 %v52
    %v572 = vunpack.c.l.b16 %v53
    %v573 = vunpack.c.l.b16 %v54
    %v574 = vunpack.c.h.b16 %v54
    %v575 = vunpack.c.l.b16 %v55
    %v576 = vunpack.c.l.b16 %v56
    %v577 = vunpack.c.h.b16 %v56
    %v578 = vunpack.c.l.b16 %v57
    %v579 = vunpack.c.l.b16 %v58
    %v580 = vunpack.c.h.b16 %v58
    %v581 = vunpack.c.l.b16 %v59
    %v582 = vunpack.c.l.b16 %v60
    %v583 = vunpack.c.h.b16 %v60
    %v584 = vunpack.c.l.b16 %v61
    %v585 = vunpack.c.l.b16 %v62
    %v586 = vunpack.c.h.b16 %v62
    %v587 = vunpack.c.l.b16 %v63
    %v588 = vunpack.c.l.b16 %v64
    %v589 = vunpack.c.h.b16 %v64
    %v590 = vunpack.c.l.b16 %v65
    %v591 = vunpack.c.l.b16 %v66
    %v592 = vunpack.c.h.b16 %v66
    %v593 = vunpack.c.l.b16 %v67
    %v594 = vunpack.c.l.b16 %v68
    %v595 = vunpack.c.h.b16 %v68
    %v596 = vunpack.c.l.b16 %v69
    %v597 = vunpack.c.l.b16 %v70
    %v598 = vunpack.c.h.b16 %v70
    %v599 = vunpack.c.l.b16 %v71
    %v600 = vunpack.c.l.b16 %v72
    %v601 = vunpack.c.h.b16 %v72
    %v602 = vunpack.c.l.b16 %v73
    %v603 = vunpack.c.l.b16 %v74
    %v604 = vunpack.c.h.b16 %v74
    %v605 = vunpack.c.l.b16 %v75
    %v606 = vunpack.c.l.b16 %v76
    %v607 = vunpack.c.h.b16 %v76
    %v608 = vunpack.c.l.b16 %v77
    %v609 = vpack.c.b16 %v564, %v561
    %v610 = vpack.c.b16 %v565, %v562
    %v611 = vpack.c.b16 %v566, %v563
    %v612 = vpack.c.b16 %v570, %v567
    %v613 = vpack.c.b16 %v571, %v568
    %v614 = vpack.c.b16 %v572, %v569
    %v615 = vpack.c.b16 %v576, %v573
    %v616 = vpack.c.b16 %v577, %v574
    %v617 = vpack.c.b16 %v578, %v575
    %v618 = vpack.c.b16 %v582, %v579
    %v619 = vpack.c.b16 %v583, %v580
    %v620 = vpack.c.b16 %v584, %v581
    %v621 = vpack.c.b16 %v588, %v585
    %v622 = vpack.c.b16 %v589, %v586
    %v623 = vpack.c.b16 %v590, %v587
    %v624 = vpack.c.b16 %v594, %v591
    %v625 = vpack.c.b16 %v595, %v592
    %v626 = vpack.c.b16 %v596, %v593
    %v627 = vpack.c.b16 %v600, %v597
    %v628 = vpack.c.b16 %v601, %v598
    %v629 = vpack.c.b16 %v602, %v599
    %v630 = vpack.c.b16 %v606, %v603
    %v631 = vpack.c.b16 %v607, %v604
    %v632 = vpack.c.b16 %v608, %v605
    %657 = vmatprep.subr.bf16.mxu0 %v631
    %658 = vmatpush1.bf16.msra.mxu0 %v630
    %659 = vmatprep.subr.bf16.mxu0 %v628
    %660 = vmatpush1.bf16.msra.mxu0 %v627
    %661 = vmatprep.subr.bf16.mxu0 %v625
    %662 = vmatpush1.bf16.msra.mxu0 %v624
    %663 = vmatprep.subr.bf16.mxu0 %v622
    %664 = vmatpush1.bf16.msra.mxu0 %v621
    %665 = vmatprep.subr.bf16.mxu0 %v619
    %666 = vmatpush1.bf16.msra.mxu0 %v618
    %667 = vmatprep.subr.bf16.mxu0 %v616
    %668 = vmatpush1.bf16.msra.mxu0 %v615
    %669 = vmatprep.subr.bf16.mxu0 %v613
    %670 = vmatpush1.bf16.msra.mxu0 %v612
    %671 = vmatprep.subr.bf16.mxu0 %v610
    %672 = vmatpush1.bf16.msra.mxu0 %v609
    %673 = vmatprep.subr.bf16.mxu0 0
    %674 = vmatpush2.bf16.msra.mxu0 0
    %675 = vmatprep.subr.bf16.mxu0 0
    %676 = vmatpush2.bf16.msra.mxu0 0
    %677 = vmatprep.subr.bf16.mxu0 0
    %678 = vmatpush2.bf16.msra.mxu0 0
    %679 = vmatprep.subr.bf16.mxu0 0
    %680 = vmatpush2.bf16.msra.mxu0 0
    %681 = vmatprep.subr.bf16.mxu0 0
    %682 = vmatpush2.bf16.msra.mxu0 0
    %683 = vmatprep.subr.bf16.mxu0 0
    %684 = vmatpush2.bf16.msra.mxu0 0
    %685 = vmatprep.subr.bf16.mxu0 0
    %686 = vmatpush2.bf16.msra.mxu0 0
    %687 = vmatprep.subr.bf16.mxu0 0
    %688 = vmatpush2.bf16.msra.mxu0 0
    %689 = vmatprep.mubr.bf16.mxu0 0
    %690 = vmatmul.mubr.bf16.gmra.mxu0 %v528
    %v691 = vpop.f32.mrf.mxu0
    %v692 = vadd.f32 0.0, %v691
    %v693 = vpop.f32.mrf.mxu0
    %v694 = vadd.f32 0.0, %v693
    %v695 = vpop.f32.mrf.mxu0
    %v696 = vpop.f32.mrf.mxu0
    %697 = vdwg.mxu0
    %698 = vmatprep.subr.bf16.mxu0 0
    %699 = vmatpush1.bf16.msra.mxu0 %v632
    %700 = vmatprep.subr.bf16.mxu0 0
    %701 = vmatpush1.bf16.msra.mxu0 %v629
    %702 = vmatprep.subr.bf16.mxu0 0
    %703 = vmatpush1.bf16.msra.mxu0 %v626
    %704 = vmatprep.subr.bf16.mxu0 0
    %705 = vmatpush1.bf16.msra.mxu0 %v623
    %706 = vmatprep.subr.bf16.mxu0 0
    %707 = vmatpush1.bf16.msra.mxu0 %v620
    %708 = vmatprep.subr.bf16.mxu0 0
    %709 = vmatpush1.bf16.msra.mxu0 %v617
    %710 = vmatprep.subr.bf16.mxu0 0
    %711 = vmatpush1.bf16.msra.mxu0 %v614
    %712 = vmatprep.subr.bf16.mxu0 0
    %713 = vmatpush1.bf16.msra.mxu0 %v611
    %714 = vmatprep.subr.bf16.mxu0 0
    %715 = vmatpush2.bf16.msra.mxu0 0
    %716 = vmatprep.subr.bf16.mxu0 0
    %717 = vmatpush2.bf16.msra.mxu0 0
    %718 = vmatprep.subr.bf16.mxu0 0
    %719 = vmatpush2.bf16.msra.mxu0 0
    %720 = vmatprep.subr.bf16.mxu0 0
    %721 = vmatpush2.bf16.msra.mxu0 0
    %722 = vmatprep.subr.bf16.mxu0 0
    %723 = vmatpush2.bf16.msra.mxu0 0
    %724 = vmatprep.subr.bf16.mxu0 0
    %725 = vmatpush2.bf16.msra.mxu0 0
    %726 = vmatprep.subr.bf16.mxu0 0
    %727 = vmatpush2.bf16.msra.mxu0 0
    %728 = vmatprep.subr.bf16.mxu0 0
    %729 = vmatpush2.bf16.msra.mxu0 0
    %730 = vmatprep.mubr.bf16.mxu0 0
    %731 = vmatmul.mubr.bf16.gmra.mxu0 %v528
    %v732 = vpop.f32.mrf.mxu0
    %v733 = vadd.f32 0.0, %v732
    %v734 = vpop.f32.mrf.mxu0
    %v735 = vpop.f32.mrf.mxu0
    %v736 = vpop.f32.mrf.mxu0
    %737 = vdwg.mxu0
    %v738 = vadd.f32 %v279, %v692
    %v739 = vxor.u32 %v738, 2147483648
    %v740 = vmul.f32 %v739, 1.442695
    %v741 = vpow.pop %v740
    %v742 = vadd.f32 %v741, 1.0
    %v743 = vrcp.pop %v742
    %v744 = vmul.f32 1.0, %v743
    %v745 = vadd.f32 %v281, %v694
    %v746 = vxor.u32 %v745, 2147483648
    %v747 = vmul.f32 %v746, 1.442695
    %v748 = vpow.pop %v747
    %v749 = vadd.f32 %v748, 1.0
    %v750 = vrcp.pop %v749
    %v751 = vmul.f32 1.0, %v750
    %v752 = vadd.f32 %v733, %v113
    %v753 = vmul.f32 %v744, %v752
    %v754 = vadd.f32 %v351, %v753
    %v755 = vtanh.pop %v754
    %v756 = vsub.f32 %v527, %v755
    %v757 = vmul.f32 %v751, %v756
    %v758 = vadd.f32 %v755, %v757
    %v759 = vpack.c.bf16 %v758, %v758
    %760 = vmatprep.subr.bf16.mxu0 %v631
    %761 = vmatpush1.bf16.msra.mxu0 %v630
    %762 = vmatprep.subr.bf16.mxu0 %v628
    %763 = vmatpush1.bf16.msra.mxu0 %v627
    %764 = vmatprep.subr.bf16.mxu0 %v625
    %765 = vmatpush1.bf16.msra.mxu0 %v624
    %766 = vmatprep.subr.bf16.mxu0 %v622
    %767 = vmatpush1.bf16.msra.mxu0 %v621
    %768 = vmatprep.subr.bf16.mxu0 %v619
    %769 = vmatpush1.bf16.msra.mxu0 %v618
    %770 = vmatprep.subr.bf16.mxu0 %v616
    %771 = vmatpush1.bf16.msra.mxu0 %v615
    %772 = vmatprep.subr.bf16.mxu0 %v613
    %773 = vmatpush1.bf16.msra.mxu0 %v612
    %774 = vmatprep.subr.bf16.mxu0 %v610
    %775 = vmatpush1.bf16.msra.mxu0 %v609
    %776 = vmatprep.subr.bf16.mxu0 0
    %777 = vmatpush2.bf16.msra.mxu0 0
    %778 = vmatprep.subr.bf16.mxu0 0
    %779 = vmatpush2.bf16.msra.mxu0 0
    %780 = vmatprep.subr.bf16.mxu0 0
    %781 = vmatpush2.bf16.msra.mxu0 0
    %782 = vmatprep.subr.bf16.mxu0 0
    %783 = vmatpush2.bf16.msra.mxu0 0
    %784 = vmatprep.subr.bf16.mxu0 0
    %785 = vmatpush2.bf16.msra.mxu0 0
    %786 = vmatprep.subr.bf16.mxu0 0
    %787 = vmatpush2.bf16.msra.mxu0 0
    %788 = vmatprep.subr.bf16.mxu0 0
    %789 = vmatpush2.bf16.msra.mxu0 0
    %790 = vmatprep.subr.bf16.mxu0 0
    %791 = vmatpush2.bf16.msra.mxu0 0
    %792 = vmatprep.mubr.bf16.mxu0 0
    %793 = vmatmul.mubr.bf16.gmra.mxu0 %v759
    %v794 = vpop.f32.mrf.mxu0
    %v795 = vadd.f32 0.0, %v794
    %v796 = vpop.f32.mrf.mxu0
    %v797 = vadd.f32 0.0, %v796
    %v798 = vpop.f32.mrf.mxu0
    %v799 = vpop.f32.mrf.mxu0
    %800 = vdwg.mxu0
    %801 = vmatprep.subr.bf16.mxu0 0
    %802 = vmatpush1.bf16.msra.mxu0 %v632
    %803 = vmatprep.subr.bf16.mxu0 0
    %804 = vmatpush1.bf16.msra.mxu0 %v629
    %805 = vmatprep.subr.bf16.mxu0 0
    %806 = vmatpush1.bf16.msra.mxu0 %v626
    %807 = vmatprep.subr.bf16.mxu0 0
    %808 = vmatpush1.bf16.msra.mxu0 %v623
    %809 = vmatprep.subr.bf16.mxu0 0
    %810 = vmatpush1.bf16.msra.mxu0 %v620
    %811 = vmatprep.subr.bf16.mxu0 0
    %812 = vmatpush1.bf16.msra.mxu0 %v617
    %813 = vmatprep.subr.bf16.mxu0 0
    %814 = vmatpush1.bf16.msra.mxu0 %v614
    %815 = vmatprep.subr.bf16.mxu0 0
    %816 = vmatpush1.bf16.msra.mxu0 %v611
    %817 = vmatprep.subr.bf16.mxu0 0
    %818 = vmatpush2.bf16.msra.mxu0 0
    %819 = vmatprep.subr.bf16.mxu0 0
    %820 = vmatpush2.bf16.msra.mxu0 0
    %821 = vmatprep.subr.bf16.mxu0 0
    %822 = vmatpush2.bf16.msra.mxu0 0
    %823 = vmatprep.subr.bf16.mxu0 0
    %824 = vmatpush2.bf16.msra.mxu0 0
    %825 = vmatprep.subr.bf16.mxu0 0
    %826 = vmatpush2.bf16.msra.mxu0 0
    %827 = vmatprep.subr.bf16.mxu0 0
    %828 = vmatpush2.bf16.msra.mxu0 0
    %829 = vmatprep.subr.bf16.mxu0 0
    %830 = vmatpush2.bf16.msra.mxu0 0
    %831 = vmatprep.subr.bf16.mxu0 0
    %832 = vmatpush2.bf16.msra.mxu0 0
    %833 = vmatprep.mubr.bf16.mxu0 0
    %834 = vmatmul.mubr.bf16.gmra.mxu0 %v759
    %v835 = vpop.f32.mrf.mxu0
    %v836 = vadd.f32 0.0, %v835
    %v837 = vpop.f32.mrf.mxu0
    %v838 = vpop.f32.mrf.mxu0
    %v839 = vpop.f32.mrf.mxu0
    %840 = vdwg.mxu0
    %v841 = vadd.f32 %v285, %v795
    %v842 = vxor.u32 %v841, 2147483648
    %v843 = vmul.f32 %v842, 1.442695
    %v844 = vpow.pop %v843
    %v845 = vadd.f32 %v844, 1.0
    %v846 = vrcp.pop %v845
    %v847 = vmul.f32 1.0, %v846
    %v848 = vadd.f32 %v287, %v797
    %v849 = vxor.u32 %v848, 2147483648
    %v850 = vmul.f32 %v849, 1.442695
    %v851 = vpow.pop %v850
    %v852 = vadd.f32 %v851, 1.0
    %v853 = vrcp.pop %v852
    %v854 = vmul.f32 1.0, %v853
    %v855 = vadd.f32 %v836, %v113
    %v856 = vmul.f32 %v847, %v855
    %v857 = vadd.f32 %v356, %v856
    %v858 = vtanh.pop %v857
    %v859 = vsub.f32 %v758, %v858
    %v860 = vmul.f32 %v854, %v859
    %v861 = vadd.f32 %v858, %v860
    %v862 = vpack.c.bf16 %v861, %v861
    %863 = vmatprep.subr.bf16.mxu0 %v631
    %864 = vmatpush1.bf16.msra.mxu0 %v630
    %865 = vmatprep.subr.bf16.mxu0 %v628
    %866 = vmatpush1.bf16.msra.mxu0 %v627
    %867 = vmatprep.subr.bf16.mxu0 %v625
    %868 = vmatpush1.bf16.msra.mxu0 %v624
    %869 = vmatprep.subr.bf16.mxu0 %v622
    %870 = vmatpush1.bf16.msra.mxu0 %v621
    %871 = vmatprep.subr.bf16.mxu0 %v619
    %872 = vmatpush1.bf16.msra.mxu0 %v618
    %873 = vmatprep.subr.bf16.mxu0 %v616
    %874 = vmatpush1.bf16.msra.mxu0 %v615
    %875 = vmatprep.subr.bf16.mxu0 %v613
    %876 = vmatpush1.bf16.msra.mxu0 %v612
    %877 = vmatprep.subr.bf16.mxu0 %v610
    %878 = vmatpush1.bf16.msra.mxu0 %v609
    %879 = vmatprep.subr.bf16.mxu0 0
    %880 = vmatpush2.bf16.msra.mxu0 0
    %881 = vmatprep.subr.bf16.mxu0 0
    %882 = vmatpush2.bf16.msra.mxu0 0
    %883 = vmatprep.subr.bf16.mxu0 0
    %884 = vmatpush2.bf16.msra.mxu0 0
    %885 = vmatprep.subr.bf16.mxu0 0
    %886 = vmatpush2.bf16.msra.mxu0 0
    %887 = vmatprep.subr.bf16.mxu0 0
    %888 = vmatpush2.bf16.msra.mxu0 0
    %889 = vmatprep.subr.bf16.mxu0 0
    %890 = vmatpush2.bf16.msra.mxu0 0
    %891 = vmatprep.subr.bf16.mxu0 0
    %892 = vmatpush2.bf16.msra.mxu0 0
    %893 = vmatprep.subr.bf16.mxu0 0
    %894 = vmatpush2.bf16.msra.mxu0 0
    %895 = vmatprep.mubr.bf16.mxu0 0
    %896 = vmatmul.mubr.bf16.gmra.mxu0 %v862
    %v897 = vpop.f32.mrf.mxu0
    %v898 = vadd.f32 0.0, %v897
    %v899 = vpop.f32.mrf.mxu0
    %v900 = vadd.f32 0.0, %v899
    %v901 = vpop.f32.mrf.mxu0
    %v902 = vpop.f32.mrf.mxu0
    %903 = vdwg.mxu0
    %904 = vmatprep.subr.bf16.mxu0 0
    %905 = vmatpush1.bf16.msra.mxu0 %v632
    %906 = vmatprep.subr.bf16.mxu0 0
    %907 = vmatpush1.bf16.msra.mxu0 %v629
    %908 = vmatprep.subr.bf16.mxu0 0
    %909 = vmatpush1.bf16.msra.mxu0 %v626
    %910 = vmatprep.subr.bf16.mxu0 0
    %911 = vmatpush1.bf16.msra.mxu0 %v623
    %912 = vmatprep.subr.bf16.mxu0 0
    %913 = vmatpush1.bf16.msra.mxu0 %v620
    %914 = vmatprep.subr.bf16.mxu0 0
    %915 = vmatpush1.bf16.msra.mxu0 %v617
    %916 = vmatprep.subr.bf16.mxu0 0
    %917 = vmatpush1.bf16.msra.mxu0 %v614
    %918 = vmatprep.subr.bf16.mxu0 0
    %919 = vmatpush1.bf16.msra.mxu0 %v611
    %920 = vmatprep.subr.bf16.mxu0 0
    %921 = vmatpush2.bf16.msra.mxu0 0
    %922 = vmatprep.subr.bf16.mxu0 0
    %923 = vmatpush2.bf16.msra.mxu0 0
    %924 = vmatprep.subr.bf16.mxu0 0
    %925 = vmatpush2.bf16.msra.mxu0 0
    %926 = vmatprep.subr.bf16.mxu0 0
    %927 = vmatpush2.bf16.msra.mxu0 0
    %928 = vmatprep.subr.bf16.mxu0 0
    %929 = vmatpush2.bf16.msra.mxu0 0
    %930 = vmatprep.subr.bf16.mxu0 0
    %931 = vmatpush2.bf16.msra.mxu0 0
    %932 = vmatprep.subr.bf16.mxu0 0
    %933 = vmatpush2.bf16.msra.mxu0 0
    %934 = vmatprep.subr.bf16.mxu0 0
    %935 = vmatpush2.bf16.msra.mxu0 0
    %936 = vmatprep.mubr.bf16.mxu0 0
    %937 = vmatmul.mubr.bf16.gmra.mxu0 %v862
    %v938 = vpop.f32.mrf.mxu0
    %v939 = vadd.f32 0.0, %v938
    %v940 = vpop.f32.mrf.mxu0
    %v941 = vpop.f32.mrf.mxu0
    %v942 = vpop.f32.mrf.mxu0
    %943 = vdwg.mxu0
    %v944 = vadd.f32 %v289, %v898
    %v945 = vxor.u32 %v944, 2147483648
    %v946 = vmul.f32 %v945, 1.442695
    %v947 = vpow.pop %v946
    %v948 = vadd.f32 %v947, 1.0
    %v949 = vrcp.pop %v948
    %v950 = vmul.f32 1.0, %v949
    %v951 = vadd.f32 %v291, %v900
    %v952 = vxor.u32 %v951, 2147483648
    %v953 = vmul.f32 %v952, 1.442695
    %v954 = vpow.pop %v953
    %v955 = vadd.f32 %v954, 1.0
    %v956 = vrcp.pop %v955
    %v957 = vmul.f32 1.0, %v956
    %v958 = vadd.f32 %v939, %v113
    %v959 = vmul.f32 %v950, %v958
    %v960 = vadd.f32 %v359, %v959
    %v961 = vtanh.pop %v960
    %v962 = vsub.f32 %v861, %v961
    %v963 = vmul.f32 %v957, %v962
    %v964 = vadd.f32 %v961, %v963
    %v965 = vpack.c.bf16 %v964, %v964
    %966 = vmatprep.subr.bf16.mxu0 %v631
    %967 = vmatpush1.bf16.msra.mxu0 %v630
    %968 = vmatprep.subr.bf16.mxu0 %v628
    %969 = vmatpush1.bf16.msra.mxu0 %v627
    %970 = vmatprep.subr.bf16.mxu0 %v625
    %971 = vmatpush1.bf16.msra.mxu0 %v624
    %972 = vmatprep.subr.bf16.mxu0 %v622
    %973 = vmatpush1.bf16.msra.mxu0 %v621
    %974 = vmatprep.subr.bf16.mxu0 %v619
    %975 = vmatpush1.bf16.msra.mxu0 %v618
    %976 = vmatprep.subr.bf16.mxu0 %v616
    %977 = vmatpush1.bf16.msra.mxu0 %v615
    %978 = vmatprep.subr.bf16.mxu0 %v613
    %979 = vmatpush1.bf16.msra.mxu0 %v612
    %980 = vmatprep.subr.bf16.mxu0 %v610
    %981 = vmatpush1.bf16.msra.mxu0 %v609
    %982 = vmatprep.subr.bf16.mxu0 0
    %983 = vmatpush2.bf16.msra.mxu0 0
    %984 = vmatprep.subr.bf16.mxu0 0
    %985 = vmatpush2.bf16.msra.mxu0 0
    %986 = vmatprep.subr.bf16.mxu0 0
    %987 = vmatpush2.bf16.msra.mxu0 0
    %988 = vmatprep.subr.bf16.mxu0 0
    %989 = vmatpush2.bf16.msra.mxu0 0
    %990 = vmatprep.subr.bf16.mxu0 0
    %991 = vmatpush2.bf16.msra.mxu0 0
    %992 = vmatprep.subr.bf16.mxu0 0
    %993 = vmatpush2.bf16.msra.mxu0 0
    %994 = vmatprep.subr.bf16.mxu0 0
    %995 = vmatpush2.bf16.msra.mxu0 0
    %996 = vmatprep.subr.bf16.mxu0 0
    %997 = vmatpush2.bf16.msra.mxu0 0
    %998 = vmatprep.mubr.bf16.mxu0 0
    %999 = vmatmul.mubr.bf16.gmra.mxu0 %v965
    %v1000 = vpop.f32.mrf.mxu0
    %v1001 = vadd.f32 0.0, %v1000
    %v1002 = vpop.f32.mrf.mxu0
    %v1003 = vadd.f32 0.0, %v1002
    %v1004 = vpop.f32.mrf.mxu0
    %v1005 = vpop.f32.mrf.mxu0
    %1006 = vdwg.mxu0
    %1007 = vmatprep.subr.bf16.mxu0 0
    %1008 = vmatpush1.bf16.msra.mxu0 %v632
    %1009 = vmatprep.subr.bf16.mxu0 0
    %1010 = vmatpush1.bf16.msra.mxu0 %v629
    %1011 = vmatprep.subr.bf16.mxu0 0
    %1012 = vmatpush1.bf16.msra.mxu0 %v626
    %1013 = vmatprep.subr.bf16.mxu0 0
    %1014 = vmatpush1.bf16.msra.mxu0 %v623
    %1015 = vmatprep.subr.bf16.mxu0 0
    %1016 = vmatpush1.bf16.msra.mxu0 %v620
    %1017 = vmatprep.subr.bf16.mxu0 0
    %1018 = vmatpush1.bf16.msra.mxu0 %v617
    %1019 = vmatprep.subr.bf16.mxu0 0
    %1020 = vmatpush1.bf16.msra.mxu0 %v614
    %1021 = vmatprep.subr.bf16.mxu0 0
    %1022 = vmatpush1.bf16.msra.mxu0 %v611
    %1023 = vmatprep.subr.bf16.mxu0 0
    %1024 = vmatpush2.bf16.msra.mxu0 0
    %1025 = vmatprep.subr.bf16.mxu0 0
    %1026 = vmatpush2.bf16.msra.mxu0 0
    %1027 = vmatprep.subr.bf16.mxu0 0
    %1028 = vmatpush2.bf16.msra.mxu0 0
    %1029 = vmatprep.subr.bf16.mxu0 0
    %1030 = vmatpush2.bf16.msra.mxu0 0
    %1031 = vmatprep.subr.bf16.mxu0 0
    %1032 = vmatpush2.bf16.msra.mxu0 0
    %1033 = vmatprep.subr.bf16.mxu0 0
    %1034 = vmatpush2.bf16.msra.mxu0 0
    %1035 = vmatprep.subr.bf16.mxu0 0
    %1036 = vmatpush2.bf16.msra.mxu0 0
    %1037 = vmatprep.subr.bf16.mxu0 0
    %1038 = vmatpush2.bf16.msra.mxu0 0
    %1039 = vmatprep.mubr.bf16.mxu0 0
    %1040 = vmatmul.mubr.bf16.gmra.mxu0 %v965
    %v1041 = vpop.f32.mrf.mxu0
    %v1042 = vadd.f32 0.0, %v1041
    %v1043 = vpop.f32.mrf.mxu0
    %v1044 = vpop.f32.mrf.mxu0
    %v1045 = vpop.f32.mrf.mxu0
    %1046 = vdwg.mxu0
    %v1047 = vadd.f32 %v295, %v1001
    %v1048 = vxor.u32 %v1047, 2147483648
    %v1049 = vmul.f32 %v1048, 1.442695
    %v1050 = vpow.pop %v1049
    %v1051 = vadd.f32 %v1050, 1.0
    %v1052 = vrcp.pop %v1051
    %v1053 = vmul.f32 1.0, %v1052
    %v1054 = vadd.f32 %v297, %v1003
    %v1055 = vxor.u32 %v1054, 2147483648
    %v1056 = vmul.f32 %v1055, 1.442695
    %v1057 = vpow.pop %v1056
    %v1058 = vadd.f32 %v1057, 1.0
    %v1059 = vrcp.pop %v1058
    %v1060 = vmul.f32 1.0, %v1059
    %v1061 = vadd.f32 %v1042, %v113
    %v1062 = vmul.f32 %v1053, %v1061
    %v1063 = vadd.f32 %v364, %v1062
    %v1064 = vtanh.pop %v1063
    %v1065 = vsub.f32 %v964, %v1064
    %v1066 = vmul.f32 %v1060, %v1065
    %v1067 = vadd.f32 %v1064, %v1066
    %v1068 = vpack.c.bf16 %v1067, %v1067
    %1069 = vmatprep.subr.bf16.mxu0 %v631
    %1070 = vmatpush1.bf16.msra.mxu0 %v630
    %1071 = vmatprep.subr.bf16.mxu0 %v628
    %1072 = vmatpush1.bf16.msra.mxu0 %v627
    %1073 = vmatprep.subr.bf16.mxu0 %v625
    %1074 = vmatpush1.bf16.msra.mxu0 %v624
    %1075 = vmatprep.subr.bf16.mxu0 %v622
    %1076 = vmatpush1.bf16.msra.mxu0 %v621
    %1077 = vmatprep.subr.bf16.mxu0 %v619
    %1078 = vmatpush1.bf16.msra.mxu0 %v618
    %1079 = vmatprep.subr.bf16.mxu0 %v616
    %1080 = vmatpush1.bf16.msra.mxu0 %v615
    %1081 = vmatprep.subr.bf16.mxu0 %v613
    %1082 = vmatpush1.bf16.msra.mxu0 %v612
    %1083 = vmatprep.subr.bf16.mxu0 %v610
    %1084 = vmatpush1.bf16.msra.mxu0 %v609
    %1085 = vmatprep.subr.bf16.mxu0 0
    %1086 = vmatpush2.bf16.msra.mxu0 0
    %1087 = vmatprep.subr.bf16.mxu0 0
    %1088 = vmatpush2.bf16.msra.mxu0 0
    %1089 = vmatprep.subr.bf16.mxu0 0
    %1090 = vmatpush2.bf16.msra.mxu0 0
    %1091 = vmatprep.subr.bf16.mxu0 0
    %1092 = vmatpush2.bf16.msra.mxu0 0
    %1093 = vmatprep.subr.bf16.mxu0 0
    %1094 = vmatpush2.bf16.msra.mxu0 0
    %1095 = vmatprep.subr.bf16.mxu0 0
    %1096 = vmatpush2.bf16.msra.mxu0 0
    %1097 = vmatprep.subr.bf16.mxu0 0
    %1098 = vmatpush2.bf16.msra.mxu0 0
    %1099 = vmatprep.subr.bf16.mxu0 0
    %1100 = vmatpush2.bf16.msra.mxu0 0
    %1101 = vmatprep.mubr.bf16.mxu0 0
    %1102 = vmatmul.mubr.bf16.gmra.mxu0 %v1068
    %v1103 = vpop.f32.mrf.mxu0
    %v1104 = vadd.f32 0.0, %v1103
    %v1105 = vpop.f32.mrf.mxu0
    %v1106 = vadd.f32 0.0, %v1105
    %v1107 = vpop.f32.mrf.mxu0
    %v1108 = vpop.f32.mrf.mxu0
    %1109 = vdwg.mxu0
    %1110 = vmatprep.subr.bf16.mxu0 0
    %1111 = vmatpush1.bf16.msra.mxu0 %v632
    %1112 = vmatprep.subr.bf16.mxu0 0
    %1113 = vmatpush1.bf16.msra.mxu0 %v629
    %1114 = vmatprep.subr.bf16.mxu0 0
    %1115 = vmatpush1.bf16.msra.mxu0 %v626
    %1116 = vmatprep.subr.bf16.mxu0 0
    %1117 = vmatpush1.bf16.msra.mxu0 %v623
    %1118 = vmatprep.subr.bf16.mxu0 0
    %1119 = vmatpush1.bf16.msra.mxu0 %v620
    %1120 = vmatprep.subr.bf16.mxu0 0
    %1121 = vmatpush1.bf16.msra.mxu0 %v617
    %1122 = vmatprep.subr.bf16.mxu0 0
    %1123 = vmatpush1.bf16.msra.mxu0 %v614
    %1124 = vmatprep.subr.bf16.mxu0 0
    %1125 = vmatpush1.bf16.msra.mxu0 %v611
    %1126 = vmatprep.subr.bf16.mxu0 0
    %1127 = vmatpush2.bf16.msra.mxu0 0
    %1128 = vmatprep.subr.bf16.mxu0 0
    %1129 = vmatpush2.bf16.msra.mxu0 0
    %1130 = vmatprep.subr.bf16.mxu0 0
    %1131 = vmatpush2.bf16.msra.mxu0 0
    %1132 = vmatprep.subr.bf16.mxu0 0
    %1133 = vmatpush2.bf16.msra.mxu0 0
    %1134 = vmatprep.subr.bf16.mxu0 0
    %1135 = vmatpush2.bf16.msra.mxu0 0
    %1136 = vmatprep.subr.bf16.mxu0 0
    %1137 = vmatpush2.bf16.msra.mxu0 0
    %1138 = vmatprep.subr.bf16.mxu0 0
    %1139 = vmatpush2.bf16.msra.mxu0 0
    %1140 = vmatprep.subr.bf16.mxu0 0
    %1141 = vmatpush2.bf16.msra.mxu0 0
    %1142 = vmatprep.mubr.bf16.mxu0 0
    %1143 = vmatmul.mubr.bf16.gmra.mxu0 %v1068
    %v1144 = vpop.f32.mrf.mxu0
    %v1145 = vadd.f32 0.0, %v1144
    %v1146 = vpop.f32.mrf.mxu0
    %v1147 = vpop.f32.mrf.mxu0
    %v1148 = vpop.f32.mrf.mxu0
    %1149 = vdwg.mxu0
    %v1150 = vadd.f32 %v299, %v1104
    %v1151 = vxor.u32 %v1150, 2147483648
    %v1152 = vmul.f32 %v1151, 1.442695
    %v1153 = vpow.pop %v1152
    %v1154 = vadd.f32 %v1153, 1.0
    %v1155 = vrcp.pop %v1154
    %v1156 = vmul.f32 1.0, %v1155
    %v1157 = vadd.f32 %v301, %v1106
    %v1158 = vxor.u32 %v1157, 2147483648
    %v1159 = vmul.f32 %v1158, 1.442695
    %v1160 = vpow.pop %v1159
    %v1161 = vadd.f32 %v1160, 1.0
    %v1162 = vrcp.pop %v1161
    %v1163 = vmul.f32 1.0, %v1162
    %v1164 = vadd.f32 %v1145, %v113
    %v1165 = vmul.f32 %v1156, %v1164
    %v1166 = vadd.f32 %v367, %v1165
    %v1167 = vtanh.pop %v1166
    %v1168 = vsub.f32 %v1067, %v1167
    %v1169 = vmul.f32 %v1163, %v1168
    %v1170 = vadd.f32 %v1167, %v1169
    %v1171 = vpack.c.bf16 %v1170, %v1170
    %1172 = vmatprep.subr.bf16.mxu0 %v631
    %1173 = vmatpush1.bf16.msra.mxu0 %v630
    %1174 = vmatprep.subr.bf16.mxu0 %v628
    %1175 = vmatpush1.bf16.msra.mxu0 %v627
    %1176 = vmatprep.subr.bf16.mxu0 %v625
    %1177 = vmatpush1.bf16.msra.mxu0 %v624
    %1178 = vmatprep.subr.bf16.mxu0 %v622
    %1179 = vmatpush1.bf16.msra.mxu0 %v621
    %1180 = vmatprep.subr.bf16.mxu0 %v619
    %1181 = vmatpush1.bf16.msra.mxu0 %v618
    %1182 = vmatprep.subr.bf16.mxu0 %v616
    %1183 = vmatpush1.bf16.msra.mxu0 %v615
    %1184 = vmatprep.subr.bf16.mxu0 %v613
    %1185 = vmatpush1.bf16.msra.mxu0 %v612
    %1186 = vmatprep.subr.bf16.mxu0 %v610
    %1187 = vmatpush1.bf16.msra.mxu0 %v609
    %1188 = vmatprep.subr.bf16.mxu0 0
    %1189 = vmatpush2.bf16.msra.mxu0 0
    %1190 = vmatprep.subr.bf16.mxu0 0
    %1191 = vmatpush2.bf16.msra.mxu0 0
    %1192 = vmatprep.subr.bf16.mxu0 0
    %1193 = vmatpush2.bf16.msra.mxu0 0
    %1194 = vmatprep.subr.bf16.mxu0 0
    %1195 = vmatpush2.bf16.msra.mxu0 0
    %1196 = vmatprep.subr.bf16.mxu0 0
    %1197 = vmatpush2.bf16.msra.mxu0 0
    %1198 = vmatprep.subr.bf16.mxu0 0
    %1199 = vmatpush2.bf16.msra.mxu0 0
    %1200 = vmatprep.subr.bf16.mxu0 0
    %1201 = vmatpush2.bf16.msra.mxu0 0
    %1202 = vmatprep.subr.bf16.mxu0 0
    %1203 = vmatpush2.bf16.msra.mxu0 0
    %1204 = vmatprep.mubr.bf16.mxu0 0
    %1205 = vmatmul.mubr.bf16.gmra.mxu0 %v1171
    %v1206 = vpop.f32.mrf.mxu0
    %v1207 = vadd.f32 0.0, %v1206
    %v1208 = vpop.f32.mrf.mxu0
    %v1209 = vadd.f32 0.0, %v1208
    %v1210 = vpop.f32.mrf.mxu0
    %v1211 = vpop.f32.mrf.mxu0
    %1212 = vdwg.mxu0
    %1213 = vmatprep.subr.bf16.mxu0 0
    %1214 = vmatpush1.bf16.msra.mxu0 %v632
    %1215 = vmatprep.subr.bf16.mxu0 0
    %1216 = vmatpush1.bf16.msra.mxu0 %v629
    %1217 = vmatprep.subr.bf16.mxu0 0
    %1218 = vmatpush1.bf16.msra.mxu0 %v626
    %1219 = vmatprep.subr.bf16.mxu0 0
    %1220 = vmatpush1.bf16.msra.mxu0 %v623
    %1221 = vmatprep.subr.bf16.mxu0 0
    %1222 = vmatpush1.bf16.msra.mxu0 %v620
    %1223 = vmatprep.subr.bf16.mxu0 0
    %1224 = vmatpush1.bf16.msra.mxu0 %v617
    %1225 = vmatprep.subr.bf16.mxu0 0
    %1226 = vmatpush1.bf16.msra.mxu0 %v614
    %1227 = vmatprep.subr.bf16.mxu0 0
    %1228 = vmatpush1.bf16.msra.mxu0 %v611
    %1229 = vmatprep.subr.bf16.mxu0 0
    %1230 = vmatpush2.bf16.msra.mxu0 0
    %1231 = vmatprep.subr.bf16.mxu0 0
    %1232 = vmatpush2.bf16.msra.mxu0 0
    %1233 = vmatprep.subr.bf16.mxu0 0
    %1234 = vmatpush2.bf16.msra.mxu0 0
    %1235 = vmatprep.subr.bf16.mxu0 0
    %1236 = vmatpush2.bf16.msra.mxu0 0
    %1237 = vmatprep.subr.bf16.mxu0 0
    %1238 = vmatpush2.bf16.msra.mxu0 0
    %1239 = vmatprep.subr.bf16.mxu0 0
    %1240 = vmatpush2.bf16.msra.mxu0 0
    %1241 = vmatprep.subr.bf16.mxu0 0
    %1242 = vmatpush2.bf16.msra.mxu0 0
    %1243 = vmatprep.subr.bf16.mxu0 0
    %1244 = vmatpush2.bf16.msra.mxu0 0
    %1245 = vmatprep.mubr.bf16.mxu0 0
    %1246 = vmatmul.mubr.bf16.gmra.mxu0 %v1171
    %v1247 = vpop.f32.mrf.mxu0
    %v1248 = vadd.f32 0.0, %v1247
    %v1249 = vpop.f32.mrf.mxu0
    %v1250 = vpop.f32.mrf.mxu0
    %v1251 = vpop.f32.mrf.mxu0
    %1252 = vdwg.mxu0
    %v1253 = vadd.f32 %v305, %v1207
    %v1254 = vxor.u32 %v1253, 2147483648
    %v1255 = vmul.f32 %v1254, 1.442695
    %v1256 = vpow.pop %v1255
    %v1257 = vadd.f32 %v1256, 1.0
    %v1258 = vrcp.pop %v1257
    %v1259 = vmul.f32 1.0, %v1258
    %v1260 = vadd.f32 %v307, %v1209
    %v1261 = vxor.u32 %v1260, 2147483648
    %v1262 = vmul.f32 %v1261, 1.442695
    %v1263 = vpow.pop %v1262
    %v1264 = vadd.f32 %v1263, 1.0
    %v1265 = vrcp.pop %v1264
    %v1266 = vmul.f32 1.0, %v1265
    %v1267 = vadd.f32 %v1248, %v113
    %v1268 = vmul.f32 %v1259, %v1267
    %v1269 = vadd.f32 %v372, %v1268
    %v1270 = vtanh.pop %v1269
    %v1271 = vsub.f32 %v1170, %v1270
    %v1272 = vmul.f32 %v1266, %v1271
    %v1273 = vadd.f32 %v1270, %v1272
    %v1274 = vpack.c.bf16 %v1273, %v1273
    %1275 = vmatprep.subr.bf16.mxu0 %v631
    %1276 = vmatpush1.bf16.msra.mxu0 %v630
    %1277 = vmatprep.subr.bf16.mxu0 %v628
    %1278 = vmatpush1.bf16.msra.mxu0 %v627
    %1279 = vmatprep.subr.bf16.mxu0 %v625
    %1280 = vmatpush1.bf16.msra.mxu0 %v624
    %1281 = vmatprep.subr.bf16.mxu0 %v622
    %1282 = vmatpush1.bf16.msra.mxu0 %v621
    %1283 = vmatprep.subr.bf16.mxu0 %v619
    %1284 = vmatpush1.bf16.msra.mxu0 %v618
    %1285 = vmatprep.subr.bf16.mxu0 %v616
    %1286 = vmatpush1.bf16.msra.mxu0 %v615
    %1287 = vmatprep.subr.bf16.mxu0 %v613
    %1288 = vmatpush1.bf16.msra.mxu0 %v612
    %1289 = vmatprep.subr.bf16.mxu0 %v610
    %1290 = vmatpush1.bf16.msra.mxu0 %v609
    %1291 = vmatprep.subr.bf16.mxu0 0
    %1292 = vmatpush2.bf16.msra.mxu0 0
    %1293 = vmatprep.subr.bf16.mxu0 0
    %1294 = vmatpush2.bf16.msra.mxu0 0
    %1295 = vmatprep.subr.bf16.mxu0 0
    %1296 = vmatpush2.bf16.msra.mxu0 0
    %1297 = vmatprep.subr.bf16.mxu0 0
    %1298 = vmatpush2.bf16.msra.mxu0 0
    %1299 = vmatprep.subr.bf16.mxu0 0
    %1300 = vmatpush2.bf16.msra.mxu0 0
    %1301 = vmatprep.subr.bf16.mxu0 0
    %1302 = vmatpush2.bf16.msra.mxu0 0
    %1303 = vmatprep.subr.bf16.mxu0 0
    %1304 = vmatpush2.bf16.msra.mxu0 0
    %1305 = vmatprep.subr.bf16.mxu0 0
    %1306 = vmatpush2.bf16.msra.mxu0 0
    %1307 = vmatprep.mubr.bf16.mxu0 0
    %1308 = vmatmul.mubr.bf16.gmra.mxu0 %v1274
    %v1309 = vpop.f32.mrf.mxu0
    %v1310 = vadd.f32 0.0, %v1309
    %v1311 = vpop.f32.mrf.mxu0
    %v1312 = vadd.f32 0.0, %v1311
    %v1313 = vpop.f32.mrf.mxu0
    %v1314 = vpop.f32.mrf.mxu0
    %1315 = vdwg.mxu0
    %1316 = vmatprep.subr.bf16.mxu0 0
    %1317 = vmatpush1.bf16.msra.mxu0 %v632
    %1318 = vmatprep.subr.bf16.mxu0 0
    %1319 = vmatpush1.bf16.msra.mxu0 %v629
    %1320 = vmatprep.subr.bf16.mxu0 0
    %1321 = vmatpush1.bf16.msra.mxu0 %v626
    %1322 = vmatprep.subr.bf16.mxu0 0
    %1323 = vmatpush1.bf16.msra.mxu0 %v623
    %1324 = vmatprep.subr.bf16.mxu0 0
    %1325 = vmatpush1.bf16.msra.mxu0 %v620
    %1326 = vmatprep.subr.bf16.mxu0 0
    %1327 = vmatpush1.bf16.msra.mxu0 %v617
    %1328 = vmatprep.subr.bf16.mxu0 0
    %1329 = vmatpush1.bf16.msra.mxu0 %v614
    %1330 = vmatprep.subr.bf16.mxu0 0
    %1331 = vmatpush1.bf16.msra.mxu0 %v611
    %1332 = vmatprep.subr.bf16.mxu0 0
    %1333 = vmatpush2.bf16.msra.mxu0 0
    %1334 = vmatprep.subr.bf16.mxu0 0
    %1335 = vmatpush2.bf16.msra.mxu0 0
    %1336 = vmatprep.subr.bf16.mxu0 0
    %1337 = vmatpush2.bf16.msra.mxu0 0
    %1338 = vmatprep.subr.bf16.mxu0 0
    %1339 = vmatpush2.bf16.msra.mxu0 0
    %1340 = vmatprep.subr.bf16.mxu0 0
    %1341 = vmatpush2.bf16.msra.mxu0 0
    %1342 = vmatprep.subr.bf16.mxu0 0
    %1343 = vmatpush2.bf16.msra.mxu0 0
    %1344 = vmatprep.subr.bf16.mxu0 0
    %1345 = vmatpush2.bf16.msra.mxu0 0
    %1346 = vmatprep.subr.bf16.mxu0 0
    %1347 = vmatpush2.bf16.msra.mxu0 0
    %1348 = vmatprep.mubr.bf16.mxu0 0
    %1349 = vmatmul.mubr.bf16.gmra.mxu0 %v1274
    %v1350 = vpop.f32.mrf.mxu0
    %v1351 = vadd.f32 0.0, %v1350
    %v1352 = vpop.f32.mrf.mxu0
    %v1353 = vpop.f32.mrf.mxu0
    %v1354 = vpop.f32.mrf.mxu0
    %1355 = vdwg.mxu0
    %v1356 = vadd.f32 %v309, %v1310
    %v1357 = vxor.u32 %v1356, 2147483648
    %v1358 = vmul.f32 %v1357, 1.442695
    %v1359 = vpow.pop %v1358
    %v1360 = vadd.f32 %v1359, 1.0
    %v1361 = vrcp.pop %v1360
    %v1362 = vmul.f32 1.0, %v1361
    %v1363 = vadd.f32 %v311, %v1312
    %v1364 = vxor.u32 %v1363, 2147483648
    %v1365 = vmul.f32 %v1364, 1.442695
    %v1366 = vpow.pop %v1365
    %v1367 = vadd.f32 %v1366, 1.0
    %v1368 = vrcp.pop %v1367
    %v1369 = vmul.f32 1.0, %v1368
    %v1370 = vadd.f32 %v1351, %v113
    %v1371 = vmul.f32 %v1362, %v1370
    %v1372 = vadd.f32 %v375, %v1371
    %v1373 = vtanh.pop %v1372
    %v1374 = vsub.f32 %v1273, %v1373
    %v1375 = vmul.f32 %v1369, %v1374
    %v1376 = vadd.f32 %v1373, %v1375
    %v1377 = vxor.u32 %v465, 2147483648
    %v1378 = vmul.f32 %v1377, 1.442695
    %v1379 = vpow.pop %v1378
    %v1380 = vadd.f32 %v1379, 1.0
    %v1381 = vrcp.pop %v1380
    %v1382 = vmul.f32 1.0, %v1381
    %v1383 = vxor.u32 %v467, 2147483648
    %v1384 = vmul.f32 %v1383, 1.442695
    %v1385 = vpow.pop %v1384
    %v1386 = vadd.f32 %v1385, 1.0
    %v1387 = vrcp.pop %v1386
    %v1388 = vmul.f32 1.0, %v1387
    %v1389 = vmul.f32 %v1382, %v114
    %v1390 = vadd.f32 %v506, %v1389
    %v1391 = vtanh.pop %v1390
    %v1392 = vmul.f32 %v1388, %v1391
    %v1393 = vsub.f32 %v1391, %v1392
    %v1394 = vpack.c.bf16 %v1376, %v1376
    %v1395 = vpack.c.bf16 %v1393, %v1393
    %v1412 = vunpack.c.l.b16 %v94
    %v1413 = vunpack.c.h.b16 %v94
    %v1414 = vunpack.c.l.b16 %v95
    %v1415 = vunpack.c.h.b16 %v95
    %v1416 = vunpack.c.l.b16 %v96
    %v1417 = vunpack.c.h.b16 %v96
    %v1418 = vunpack.c.l.b16 %v97
    %v1419 = vunpack.c.h.b16 %v97
    %v1420 = vunpack.c.l.b16 %v98
    %v1421 = vunpack.c.h.b16 %v98
    %v1422 = vunpack.c.l.b16 %v99
    %v1423 = vunpack.c.h.b16 %v99
    %v1424 = vunpack.c.l.b16 %v100
    %v1425 = vunpack.c.h.b16 %v100
    %v1426 = vunpack.c.l.b16 %v101
    %v1427 = vunpack.c.h.b16 %v101
    %v1428 = vunpack.c.l.b16 %v102
    %v1429 = vunpack.c.h.b16 %v102
    %v1430 = vunpack.c.l.b16 %v103
    %v1431 = vunpack.c.h.b16 %v103
    %v1432 = vunpack.c.l.b16 %v104
    %v1433 = vunpack.c.h.b16 %v104
    %v1434 = vunpack.c.l.b16 %v105
    %v1435 = vunpack.c.h.b16 %v105
    %v1436 = vunpack.c.l.b16 %v106
    %v1437 = vunpack.c.h.b16 %v106
    %v1438 = vunpack.c.l.b16 %v107
    %v1439 = vunpack.c.h.b16 %v107
    %v1440 = vunpack.c.l.b16 %v108
    %v1441 = vunpack.c.h.b16 %v108
    %v1442 = vunpack.c.l.b16 %v109
    %v1443 = vunpack.c.h.b16 %v109
    %v1444 = vpack.c.b16 %v1414, %v1412
    %v1445 = vpack.c.b16 %v1415, %v1413
    %v1446 = vpack.c.b16 %v1418, %v1416
    %v1447 = vpack.c.b16 %v1419, %v1417
    %v1448 = vpack.c.b16 %v1422, %v1420
    %v1449 = vpack.c.b16 %v1423, %v1421
    %v1450 = vpack.c.b16 %v1426, %v1424
    %v1451 = vpack.c.b16 %v1427, %v1425
    %v1452 = vpack.c.b16 %v1430, %v1428
    %v1453 = vpack.c.b16 %v1431, %v1429
    %v1454 = vpack.c.b16 %v1434, %v1432
    %v1455 = vpack.c.b16 %v1435, %v1433
    %v1456 = vpack.c.b16 %v1438, %v1436
    %v1457 = vpack.c.b16 %v1439, %v1437
    %v1458 = vpack.c.b16 %v1442, %v1440
    %v1459 = vpack.c.b16 %v1443, %v1441
    %1476 = vmatprep.subr.bf16.mxu0 %v1459
    %1477 = vmatpush1.bf16.msra.mxu0 %v1458
    %1478 = vmatprep.subr.bf16.mxu0 %v1457
    %1479 = vmatpush1.bf16.msra.mxu0 %v1456
    %1480 = vmatprep.subr.bf16.mxu0 %v1455
    %1481 = vmatpush1.bf16.msra.mxu0 %v1454
    %1482 = vmatprep.subr.bf16.mxu0 %v1453
    %1483 = vmatpush1.bf16.msra.mxu0 %v1452
    %1484 = vmatprep.subr.bf16.mxu0 %v1451
    %1485 = vmatpush1.bf16.msra.mxu0 %v1450
    %1486 = vmatprep.subr.bf16.mxu0 %v1449
    %1487 = vmatpush1.bf16.msra.mxu0 %v1448
    %1488 = vmatprep.subr.bf16.mxu0 %v1447
    %1489 = vmatpush1.bf16.msra.mxu0 %v1446
    %1490 = vmatprep.subr.bf16.mxu0 %v1445
    %1491 = vmatpush1.bf16.msra.mxu0 %v1444
    %1492 = vmatprep.subr.bf16.mxu0 0
    %1493 = vmatpush2.bf16.msra.mxu0 0
    %1494 = vmatprep.subr.bf16.mxu0 0
    %1495 = vmatpush2.bf16.msra.mxu0 0
    %1496 = vmatprep.subr.bf16.mxu0 0
    %1497 = vmatpush2.bf16.msra.mxu0 0
    %1498 = vmatprep.subr.bf16.mxu0 0
    %1499 = vmatpush2.bf16.msra.mxu0 0
    %1500 = vmatprep.subr.bf16.mxu0 0
    %1501 = vmatpush2.bf16.msra.mxu0 0
    %1502 = vmatprep.subr.bf16.mxu0 0
    %1503 = vmatpush2.bf16.msra.mxu0 0
    %1504 = vmatprep.subr.bf16.mxu0 0
    %1505 = vmatpush2.bf16.msra.mxu0 0
    %1506 = vmatprep.subr.bf16.mxu0 0
    %1507 = vmatpush2.bf16.msra.mxu0 0
    %1508 = vmatprep.mubr.bf16.mxu0 0
    %1509 = vmatmul.mubr.bf16.gmra.mxu0 %v1395
    %v1510 = vpop.f32.mrf.mxu0
    %v1511 = vadd.f32 0.0, %v1510
    %v1512 = vpop.f32.mrf.mxu0
    %v1513 = vpop.f32.mrf.mxu0
    %v1514 = vpop.f32.mrf.mxu0
    %1515 = vdwg.mxu0
    %v1532 = vunpack.c.l.b16 %v78
    %v1533 = vunpack.c.h.b16 %v78
    %v1534 = vunpack.c.l.b16 %v79
    %v1535 = vunpack.c.h.b16 %v79
    %v1536 = vunpack.c.l.b16 %v80
    %v1537 = vunpack.c.h.b16 %v80
    %v1538 = vunpack.c.l.b16 %v81
    %v1539 = vunpack.c.h.b16 %v81
    %v1540 = vunpack.c.l.b16 %v82
    %v1541 = vunpack.c.h.b16 %v82
    %v1542 = vunpack.c.l.b16 %v83
    %v1543 = vunpack.c.h.b16 %v83
    %v1544 = vunpack.c.l.b16 %v84
    %v1545 = vunpack.c.h.b16 %v84
    %v1546 = vunpack.c.l.b16 %v85
    %v1547 = vunpack.c.h.b16 %v85
    %v1548 = vunpack.c.l.b16 %v86
    %v1549 = vunpack.c.h.b16 %v86
    %v1550 = vunpack.c.l.b16 %v87
    %v1551 = vunpack.c.h.b16 %v87
    %v1552 = vunpack.c.l.b16 %v88
    %v1553 = vunpack.c.h.b16 %v88
    %v1554 = vunpack.c.l.b16 %v89
    %v1555 = vunpack.c.h.b16 %v89
    %v1556 = vunpack.c.l.b16 %v90
    %v1557 = vunpack.c.h.b16 %v90
    %v1558 = vunpack.c.l.b16 %v91
    %v1559 = vunpack.c.h.b16 %v91
    %v1560 = vunpack.c.l.b16 %v92
    %v1561 = vunpack.c.h.b16 %v92
    %v1562 = vunpack.c.l.b16 %v93
    %v1563 = vunpack.c.h.b16 %v93
    %v1564 = vpack.c.b16 %v1534, %v1532
    %v1565 = vpack.c.b16 %v1535, %v1533
    %v1566 = vpack.c.b16 %v1538, %v1536
    %v1567 = vpack.c.b16 %v1539, %v1537
    %v1568 = vpack.c.b16 %v1542, %v1540
    %v1569 = vpack.c.b16 %v1543, %v1541
    %v1570 = vpack.c.b16 %v1546, %v1544
    %v1571 = vpack.c.b16 %v1547, %v1545
    %v1572 = vpack.c.b16 %v1550, %v1548
    %v1573 = vpack.c.b16 %v1551, %v1549
    %v1574 = vpack.c.b16 %v1554, %v1552
    %v1575 = vpack.c.b16 %v1555, %v1553
    %v1576 = vpack.c.b16 %v1558, %v1556
    %v1577 = vpack.c.b16 %v1559, %v1557
    %v1578 = vpack.c.b16 %v1562, %v1560
    %v1579 = vpack.c.b16 %v1563, %v1561
    %1596 = vmatprep.subr.bf16.mxu0 %v1579
    %1597 = vmatpush1.bf16.msra.mxu0 %v1578
    %1598 = vmatprep.subr.bf16.mxu0 %v1577
    %1599 = vmatpush1.bf16.msra.mxu0 %v1576
    %1600 = vmatprep.subr.bf16.mxu0 %v1575
    %1601 = vmatpush1.bf16.msra.mxu0 %v1574
    %1602 = vmatprep.subr.bf16.mxu0 %v1573
    %1603 = vmatpush1.bf16.msra.mxu0 %v1572
    %1604 = vmatprep.subr.bf16.mxu0 %v1571
    %1605 = vmatpush1.bf16.msra.mxu0 %v1570
    %1606 = vmatprep.subr.bf16.mxu0 %v1569
    %1607 = vmatpush1.bf16.msra.mxu0 %v1568
    %1608 = vmatprep.subr.bf16.mxu0 %v1567
    %1609 = vmatpush1.bf16.msra.mxu0 %v1566
    %1610 = vmatprep.subr.bf16.mxu0 %v1565
    %1611 = vmatpush1.bf16.msra.mxu0 %v1564
    %1612 = vmatprep.subr.bf16.mxu0 0
    %1613 = vmatpush2.bf16.msra.mxu0 0
    %1614 = vmatprep.subr.bf16.mxu0 0
    %1615 = vmatpush2.bf16.msra.mxu0 0
    %1616 = vmatprep.subr.bf16.mxu0 0
    %1617 = vmatpush2.bf16.msra.mxu0 0
    %1618 = vmatprep.subr.bf16.mxu0 0
    %1619 = vmatpush2.bf16.msra.mxu0 0
    %1620 = vmatprep.subr.bf16.mxu0 0
    %1621 = vmatpush2.bf16.msra.mxu0 0
    %1622 = vmatprep.subr.bf16.mxu0 0
    %1623 = vmatpush2.bf16.msra.mxu0 0
    %1624 = vmatprep.subr.bf16.mxu0 0
    %1625 = vmatpush2.bf16.msra.mxu0 0
    %1626 = vmatprep.subr.bf16.mxu0 0
    %1627 = vmatpush2.bf16.msra.mxu0 0
    %1628 = vmatprep.mubr.bf16.mxu0 0
    %1629 = vmatmul.mubr.bf16.gmra.mxu0 %v1394
    %v1630 = vpop.f32.mrf.mxu0
    %v1631 = vadd.f32 %v1511, %v1630
    %v1632 = vpop.f32.mrf.mxu0
    %v1633 = vpop.f32.mrf.mxu0
    %v1634 = vpop.f32.mrf.mxu0
    %1635 = vdwg.mxu0
    %v1637 = vlaneseq
    %v1638 = vshrl.u32 %v1637, 7
    %v1639 = vsub.s32 0, %v1638
    %v1640 = vrot.slane %v116, %v1639
    %v1642 = vadd.f32 %v1631, %v1640
    %vm1643 = vcmask 25600
    %1644 = vst.msk [vmem:[#allocation5] sm:$0x3] %vm1643, %v1642
    // Predicated region
    $region18: #{_fwd.1} parent=1 // pred_check
      _
    $region19: #{_fwd.1} parent=1 // pred_check_branch
      %1646 = sbr.rel (0) target = $region21
    $region20: #{_fwd.1} parent=1 // pred_region
      %s1648 = ssub.s32 32, 32
      %1649 = vsyncadd [#allocation4], %s1648
      %s1651 = sshll.u32 [#allocation5], 4
      %s1652 = int_to_ptr.vmem [resolvable:$true] %s1651
      %1654 = dma.vmem_to_hbm [thread:$0]  %s1652, 32, %s3, [#allocation4]
    $region21: #{_fwd.1} parent=1 // pred_fallthru
      _
    // Predicated region
    $region22: #{_fwd.1} parent=1 // pred_check
      _
    $region23: #{_fwd.1} parent=1 // pred_check_branch
      %1656 = sbr.rel (0) target = $region25
    $region24: #{_fwd.1} parent=1 // pred_region
      %1657 = dma.done [#allocation4], 32
    $region25: #{_fwd.1} parent=1 // pred_fallthru
      _
    %1658 = vsyncpa [#allocation3], 1
    %1659 = vsyncpa [#allocation4], 1

</llo_original>
